<compile_context>
chip_gen: v5e
topology: v5e:2x2
jax: 0.10.0
libtpu: 0.0.40
codegen_flags: <defaults>
</compile_context>

<pallas_src>
import functools

import jax
import jax.numpy as jnp
from jax import lax
from jax.experimental import pallas as pl
from jax.experimental.pallas import tpu as pltpu


def rpe_attention_kernel(x_ref, wqkv_ref, wproj_ref, bproj_ref, o_ref,
                         *, num_heads):
    """Single-invocation kernel (no grid); whole problem resident in VMEM.

    x_ref:     (B, C, N)  tokens on the lane axis, channels on sublanes
    wqkv_ref:  (3C, C)    qkv weight (out_ch, in_ch); Q rows pre-scaled
    wproj_ref: (C, C)     proj weight (out_ch, in_ch)
    bproj_ref: (C, 1)     proj bias (broadcast over lanes)
    o_ref:     (B, C, N)
    """
    B, C, N = x_ref.shape
    H = num_heads
    hd = C // H

    # Weights loaded once; bf16 on the MXU, f32 accumulation everywhere.
    wqkv = wqkv_ref[...].astype(jnp.bfloat16)     # (3C, C)
    wproj = wproj_ref[...].astype(jnp.bfloat16)   # (C, C)
    bias = bproj_ref[...]                         # (C, 1) f32

    # B is tiny and static -> unrolled Python loop inside ONE kernel
    # invocation (single grid step); the two batch bodies are independent so
    # the scheduler can interleave their MXU / EUP work.
    for b in range(B):
        xb = x_ref[b].astype(jnp.bfloat16)        # (C, N)

        # qkv projection: (3C, C) @ (C, N) -> (3C, N).
        qkv = lax.dot_general(
            wqkv, xb, (((1,), (0,)), ((), ())),
            preferred_element_type=jnp.float32)

        # Head split along sublanes (free reshapes, sublane-group aligned).
        q = qkv[:C].reshape(H, hd, N).astype(jnp.bfloat16)        # (H, hd, N)
        k = qkv[C:2 * C].reshape(H, hd, N).astype(jnp.bfloat16)   # (H, hd, N)
        v = qkv[2 * C:].reshape(H, hd, N).astype(jnp.bfloat16)    # (H, hd, N)

        # Scores with keys on sublanes / queries on lanes:
        #   s[h, m, n] = sum_d k[h, d, m] * (scale*q)[h, d, n]
        # (scale already folded into the Q rows of wqkv).  Contracting the
        # head_dim axis of both operands is the transposed-LHS form the MXU
        # takes natively -- no XLU transpose of q or k.
        s = lax.dot_general(
            k, q, (((1,), (1,)), ((0,), (0,))),
            preferred_element_type=jnp.float32)                   # (H, Nk, Nq)

        # Numerically-stable softmax over keys (the sublane axis): cheap
        # cross-vreg VPU maxes/adds plus a short intra-vreg sublane fold.
        s = s - jnp.max(s, axis=1, keepdims=True)
        p = jnp.exp(s)
        denom = jnp.sum(p, axis=1, keepdims=True)
        p = p * pl.reciprocal(denom, approx=True)                 # EUP slot
        p = p.astype(jnp.bfloat16)

        # out[h, d, n] = sum_m v[h, d, m] * p[h, m, n]
        # Plain batched matmul (LHS-last with RHS-second-last): neither p nor
        # v needs a transpose, and the result is already channels-on-sublanes.
        out = lax.dot_general(
            v, p, (((2,), (1,)), ((0,), (0,))),
            preferred_element_type=jnp.float32)                   # (H, hd, N)

        # Head merge = free sublane reshape, fused into the projection matmul.
        merged = out.reshape(C, N).astype(jnp.bfloat16)           # (C, N)
        proj = lax.dot_general(
            wproj, merged, (((1,), (0,)), ((), ())),
            preferred_element_type=jnp.float32) + bias            # (C, N)

        o_ref[b] = proj.astype(o_ref.dtype)


def prepare_rpe_attention_params(wqkv, wproj, bproj, *, num_heads):
    """One-time (parameter-init time) weight prep for the kernel.

    wqkv: (C, 3C) and wproj: (C, C) in the `x @ W` convention (i.e. the torch
    Linear weight transposed); bproj: (C,).
    Returns (wqkv_t, wproj_t, bproj_c1) ready for rpe_attention().
    """
    C = wqkv.shape[0]
    hd = C // num_heads
    scale = hd ** (-0.5)
    # Fold the attention scale into the Q output rows of the qkv weight.
    row_scale = jnp.concatenate(
        [jnp.full((C,), scale, wqkv.dtype), jnp.ones((2 * C,), wqkv.dtype)])
    wqkv_t = wqkv.T * row_scale[:, None]                          # (3C, C)
    wproj_t = wproj.T                                             # (out, in)
    bproj_c1 = bproj.reshape(C, 1)
    return wqkv_t, wproj_t, bproj_c1


@functools.partial(jax.jit, static_argnames=("num_heads",))
def rpe_attention(x_nchw, wqkv_t, wproj_t, bproj_c1, *, num_heads):
    """x_nchw: (B, C, h, w) float32; weights pre-prepared by
    prepare_rpe_attention_params. Returns (B, C, h, w)."""
    B, C, h, w = x_nchw.shape
    N = h * w

    # NCHW -> (B, C, N): a free reshape, no transpose needed.
    x_bcn = x_nchw.reshape(B, C, N)

    kernel = functools.partial(rpe_attention_kernel, num_heads=num_heads)

    out_bcn = pl.pallas_call(
        kernel,
        out_shape=jax.ShapeDtypeStruct((B, C, N), x_bcn.dtype),
        # No grid: single invocation, everything resident in VMEM (<100 KB).
        in_specs=[
            pl.BlockSpec(memory_space=pltpu.MemorySpace.VMEM),   # x
            pl.BlockSpec(memory_space=pltpu.MemorySpace.VMEM),   # wqkv
            pl.BlockSpec(memory_space=pltpu.MemorySpace.VMEM),   # wproj
            pl.BlockSpec(memory_space=pltpu.MemorySpace.VMEM),   # bproj
        ],
        out_specs=pl.BlockSpec(memory_space=pltpu.MemorySpace.VMEM),
    )(x_bcn, wqkv_t, wproj_t, bproj_c1)

    # (B, C, N) -> NCHW is a free reshape.
    return out_bcn.reshape(B, C, h, w)


def rpe_attention_ref(x_nchw, wqkv, wproj, bproj, *, num_heads):
    """Pure-JAX f32 reference mirroring the PyTorch forward."""
    B, C, h, w = x_nchw.shape
    N = h * w
    hd = C // num_heads
    scale = hd ** (-0.5)
    x = jnp.transpose(x_nchw.reshape(B, C, N), (0, 2, 1))          # (B, N, C)
    qkv = x @ wqkv                                                 # (B, N, 3C)
    qkv = qkv.reshape(B, N, 3, num_heads, hd).transpose(2, 0, 3, 1, 4)
    q, k, v = qkv[0], qkv[1], qkv[2]                               # (B, H, N, hd)
    q = q * scale
    attn = q @ jnp.swapaxes(k, -2, -1)                             # (B, H, N, N)
    attn = jax.nn.softmax(attn, axis=-1)
    out = attn @ v                                                 # (B, H, N, hd)
    out = jnp.swapaxes(out, 1, 2).reshape(B, N, C)
    out = out @ wproj + bproj
    return jnp.transpose(out, (0, 2, 1)).reshape(B, C, h, w)


if __name__ == "__main__":
    # Small shapes consistent with the module: B=2, dim C=32, h=w=8 (N=64),
    # num_heads=4 (head_dim=8).
    B, C, h, w = 2, 32, 8, 8
    num_heads = 4

    key = jax.random.PRNGKey(0)
    kx, kqkv, kproj, kbias = jax.random.split(key, 4)

    x = jax.random.normal(kx, (B, C, h, w), dtype=jnp.float32)
    # nn.Linear(dim, 3*dim, bias=False) and nn.Linear(dim, dim), stored here
    # already transposed for the x @ W convention.
    wqkv = jax.random.normal(kqkv, (C, 3 * C), dtype=jnp.float32) * 0.05
    wproj = jax.random.normal(kproj, (C, C), dtype=jnp.float32) * 0.05
    bproj = jax.random.normal(kbias, (C,), dtype=jnp.float32) * 0.05

    # One-time weight prep (parameter-init time), not part of the hot call.
    wqkv_t, wproj_t, bproj_c1 = prepare_rpe_attention_params(
        wqkv, wproj, bproj, num_heads=num_heads)
    wqkv_t, wproj_t, bproj_c1 = jax.block_until_ready(
        (wqkv_t, wproj_t, bproj_c1))

    out = rpe_attention(x, wqkv_t, wproj_t, bproj_c1, num_heads=num_heads)
    out = jax.block_until_ready(out)

    ref = rpe_attention_ref(x, wqkv, wproj, bproj, num_heads=num_heads)
    assert out.shape == (B, C, h, w)
    # Tolerance reflects bf16 MXU operands (f32 accumulation) and the EUP
    # approx-reciprocal softmax denominator; reference is full f32.
    assert jnp.allclose(out, ref, atol=2e-2, rtol=2e-2), \
        "mismatch vs JAX reference"

    # TODO(synk): rpe_q/rpe_k/rpe_v are None for the default rpe_config=None,
    # so no iRPE bias terms are implemented here; dropouts (p=0.0) are identity.
    print("KERNEL_OK")
</pallas_src>

<mosaic_0001>
module attributes {stable_mosaic.version = 11 : i64} {
  func.func @rpe_attention_kernel(%arg0: memref<2x32x64xf32, #tpu.memory_space<vmem>>, %arg1: memref<96x32xf32, #tpu.memory_space<vmem>>, %arg2: memref<32x32xf32, #tpu.memory_space<vmem>>, %arg3: memref<32x1xf32, #tpu.memory_space<vmem>>, %arg4: memref<2x32x64xf32, #tpu.memory_space<vmem>>) attributes {dimension_semantics = [], scalar_prefetch = 0 : i64, scratch_operands = 0 : i64, tpu.core_type = #tpu.core_type<tc>} {
    %c0 = arith.constant 0 : index
    %c0_0 = arith.constant 0 : index
    %0 = vector.load %arg1[%c0, %c0_0] : memref<96x32xf32, #tpu.memory_space<vmem>>, vector<96x32xf32>
    %1 = arith.truncf %0 : vector<96x32xf32> to vector<96x32xbf16>
    %c0_1 = arith.constant 0 : index
    %c0_2 = arith.constant 0 : index
    %2 = vector.load %arg2[%c0_1, %c0_2] : memref<32x32xf32, #tpu.memory_space<vmem>>, vector<32x32xf32>
    %3 = arith.truncf %2 : vector<32x32xf32> to vector<32x32xbf16>
    %c0_3 = arith.constant 0 : index
    %c0_4 = arith.constant 0 : index
    %4 = vector.load %arg3[%c0_3, %c0_4] : memref<32x1xf32, #tpu.memory_space<vmem>>, vector<32x1xf32>
    %c0_5 = arith.constant 0 : index
    %c0_6 = arith.constant 0 : index
    %c0_7 = arith.constant 0 : index
    %5 = vector.load %arg0[%c0_5, %c0_6, %c0_7] : memref<2x32x64xf32, #tpu.memory_space<vmem>>, vector<1x32x64xf32>
    %6 = vector.shape_cast %5 : vector<1x32x64xf32> to vector<32x64xf32>
    %7 = arith.truncf %6 : vector<32x64xf32> to vector<32x64xbf16>
    %cst = arith.constant dense<0.000000e+00> : vector<96x64xf32>
    %8 = tpu.matmul %1, %7, %cst {dimension_numbers = #tpu.dot_dimension_numbers<[1], [0], [0], [1], [0, 0, 1, 1], [], []>} : vector<96x32xbf16>, vector<32x64xbf16>, vector<96x64xf32> -> vector<96x64xf32>
    %9 = vector.extract_strided_slice %8 {offsets = [0, 0], sizes = [32, 64], strides = [1, 1]} : vector<96x64xf32> to vector<32x64xf32>
    %10 = vector.shape_cast %9 : vector<32x64xf32> to vector<4x8x64xf32>
    %11 = arith.truncf %10 : vector<4x8x64xf32> to vector<4x8x64xbf16>
    %12 = vector.extract_strided_slice %8 {offsets = [32, 0], sizes = [32, 64], strides = [1, 1]} : vector<96x64xf32> to vector<32x64xf32>
    %13 = vector.shape_cast %12 : vector<32x64xf32> to vector<4x8x64xf32>
    %14 = arith.truncf %13 : vector<4x8x64xf32> to vector<4x8x64xbf16>
    %15 = vector.extract_strided_slice %8 {offsets = [64, 0], sizes = [32, 64], strides = [1, 1]} : vector<96x64xf32> to vector<32x64xf32>
    %16 = vector.shape_cast %15 : vector<32x64xf32> to vector<4x8x64xf32>
    %17 = arith.truncf %16 : vector<4x8x64xf32> to vector<4x8x64xbf16>
    %cst_8 = arith.constant dense<0.000000e+00> : vector<4x64x64xf32>
    %18 = tpu.matmul %14, %11, %cst_8 {dimension_numbers = #tpu.dot_dimension_numbers<[1], [1], [2], [2], [0, 0, 0, 2, 1, 2], [0], [0]>} : vector<4x8x64xbf16>, vector<4x8x64xbf16>, vector<4x64x64xf32> -> vector<4x64x64xf32>
    %cst_9 = arith.constant dense<0xFF800000> : vector<4x64xf32>
    %19 = vector.multi_reduction <maximumf>, %18, %cst_9 [1] : vector<4x64x64xf32> to vector<4x64xf32>
    %20 = vector.shape_cast %19 : vector<4x64xf32> to vector<4x1x64xf32>
    %21 = vector.broadcast %20 : vector<4x1x64xf32> to vector<4x64x64xf32>
    %22 = arith.subf %18, %21 : vector<4x64x64xf32>
    %23 = math.exp %22 : vector<4x64x64xf32>
    %cst_10 = arith.constant dense<0.000000e+00> : vector<4x64xf32>
    %24 = vector.multi_reduction <add>, %23, %cst_10 [1] : vector<4x64x64xf32> to vector<4x64xf32>
    %25 = vector.shape_cast %24 : vector<4x64xf32> to vector<4x1x64xf32>
    %26 = tpu.reciprocal %25 {approx = true} : vector<4x1x64xf32> -> vector<4x1x64xf32>
    %27 = vector.broadcast %26 : vector<4x1x64xf32> to vector<4x64x64xf32>
    %28 = arith.mulf %23, %27 : vector<4x64x64xf32>
    %29 = arith.truncf %28 : vector<4x64x64xf32> to vector<4x64x64xbf16>
    %cst_11 = arith.constant dense<0.000000e+00> : vector<4x8x64xf32>
    %30 = tpu.matmul %17, %29, %cst_11 {dimension_numbers = #tpu.dot_dimension_numbers<[2], [1], [1], [2], [0, 0, 0, 1, 1, 2], [0], [0]>} : vector<4x8x64xbf16>, vector<4x64x64xbf16>, vector<4x8x64xf32> -> vector<4x8x64xf32>
    %31 = vector.shape_cast %30 : vector<4x8x64xf32> to vector<32x64xf32>
    %32 = arith.truncf %31 : vector<32x64xf32> to vector<32x64xbf16>
    %cst_12 = arith.constant dense<0.000000e+00> : vector<32x64xf32>
    %33 = tpu.matmul %3, %32, %cst_12 {dimension_numbers = #tpu.dot_dimension_numbers<[1], [0], [0], [1], [0, 0, 1, 1], [], []>} : vector<32x32xbf16>, vector<32x64xbf16>, vector<32x64xf32> -> vector<32x64xf32>
    %34 = vector.broadcast %4 : vector<32x1xf32> to vector<32x64xf32>
    %35 = arith.addf %33, %34 : vector<32x64xf32>
    %c0_13 = arith.constant 0 : index
    %c0_14 = arith.constant 0 : index
    %c0_15 = arith.constant 0 : index
    %36 = vector.load %arg4[%c0_13, %c0_14, %c0_15] : memref<2x32x64xf32, #tpu.memory_space<vmem>>, vector<1x32x64xf32>
    %37 = vector.shape_cast %36 : vector<1x32x64xf32> to vector<32x64xf32>
    %38 = vector.shape_cast %35 : vector<32x64xf32> to vector<1x32x64xf32>
    tpu.vector_store %arg4[%c0_13, %c0_14, %c0_15], %38 {strides = array<i32>} : memref<2x32x64xf32, #tpu.memory_space<vmem>>, vector<1x32x64xf32>,
    %c1 = arith.constant 1 : index
    %c0_16 = arith.constant 0 : index
    %c0_17 = arith.constant 0 : index
    %39 = vector.load %arg0[%c1, %c0_16, %c0_17] : memref<2x32x64xf32, #tpu.memory_space<vmem>>, vector<1x32x64xf32>
    %40 = vector.shape_cast %39 : vector<1x32x64xf32> to vector<32x64xf32>
    %41 = arith.truncf %40 : vector<32x64xf32> to vector<32x64xbf16>
    %cst_18 = arith.constant dense<0.000000e+00> : vector<96x64xf32>
    %42 = tpu.matmul %1, %41, %cst_18 {dimension_numbers = #tpu.dot_dimension_numbers<[1], [0], [0], [1], [0, 0, 1, 1], [], []>} : vector<96x32xbf16>, vector<32x64xbf16>, vector<96x64xf32> -> vector<96x64xf32>
    %43 = vector.extract_strided_slice %42 {offsets = [0, 0], sizes = [32, 64], strides = [1, 1]} : vector<96x64xf32> to vector<32x64xf32>
    %44 = vector.shape_cast %43 : vector<32x64xf32> to vector<4x8x64xf32>
    %45 = arith.truncf %44 : vector<4x8x64xf32> to vector<4x8x64xbf16>
    %46 = vector.extract_strided_slice %42 {offsets = [32, 0], sizes = [32, 64], strides = [1, 1]} : vector<96x64xf32> to vector<32x64xf32>
    %47 = vector.shape_cast %46 : vector<32x64xf32> to vector<4x8x64xf32>
    %48 = arith.truncf %47 : vector<4x8x64xf32> to vector<4x8x64xbf16>
    %49 = vector.extract_strided_slice %42 {offsets = [64, 0], sizes = [32, 64], strides = [1, 1]} : vector<96x64xf32> to vector<32x64xf32>
    %50 = vector.shape_cast %49 : vector<32x64xf32> to vector<4x8x64xf32>
    %51 = arith.truncf %50 : vector<4x8x64xf32> to vector<4x8x64xbf16>
    %cst_19 = arith.constant dense<0.000000e+00> : vector<4x64x64xf32>
    %52 = tpu.matmul %48, %45, %cst_19 {dimension_numbers = #tpu.dot_dimension_numbers<[1], [1], [2], [2], [0, 0, 0, 2, 1, 2], [0], [0]>} : vector<4x8x64xbf16>, vector<4x8x64xbf16>, vector<4x64x64xf32> -> vector<4x64x64xf32>
    %cst_20 = arith.constant dense<0xFF800000> : vector<4x64xf32>
    %53 = vector.multi_reduction <maximumf>, %52, %cst_20 [1] : vector<4x64x64xf32> to vector<4x64xf32>
    %54 = vector.shape_cast %53 : vector<4x64xf32> to vector<4x1x64xf32>
    %55 = vector.broadcast %54 : vector<4x1x64xf32> to vector<4x64x64xf32>
    %56 = arith.subf %52, %55 : vector<4x64x64xf32>
    %57 = math.exp %56 : vector<4x64x64xf32>
    %cst_21 = arith.constant dense<0.000000e+00> : vector<4x64xf32>
    %58 = vector.multi_reduction <add>, %57, %cst_21 [1] : vector<4x64x64xf32> to vector<4x64xf32>
    %59 = vector.shape_cast %58 : vector<4x64xf32> to vector<4x1x64xf32>
    %60 = tpu.reciprocal %59 {approx = true} : vector<4x1x64xf32> -> vector<4x1x64xf32>
    %61 = vector.broadcast %60 : vector<4x1x64xf32> to vector<4x64x64xf32>
    %62 = arith.mulf %57, %61 : vector<4x64x64xf32>
    %63 = arith.truncf %62 : vector<4x64x64xf32> to vector<4x64x64xbf16>
    %cst_22 = arith.constant dense<0.000000e+00> : vector<4x8x64xf32>
    %64 = tpu.matmul %51, %63, %cst_22 {dimension_numbers = #tpu.dot_dimension_numbers<[2], [1], [1], [2], [0, 0, 0, 1, 1, 2], [0], [0]>} : vector<4x8x64xbf16>, vector<4x64x64xbf16>, vector<4x8x64xf32> -> vector<4x8x64xf32>
    %65 = vector.shape_cast %64 : vector<4x8x64xf32> to vector<32x64xf32>
    %66 = arith.truncf %65 : vector<32x64xf32> to vector<32x64xbf16>
    %cst_23 = arith.constant dense<0.000000e+00> : vector<32x64xf32>
    %67 = tpu.matmul %3, %66, %cst_23 {dimension_numbers = #tpu.dot_dimension_numbers<[1], [0], [0], [1], [0, 0, 1, 1], [], []>} : vector<32x32xbf16>, vector<32x64xbf16>, vector<32x64xf32> -> vector<32x64xf32>
    %68 = vector.broadcast %4 : vector<32x1xf32> to vector<32x64xf32>
    %69 = arith.addf %67, %68 : vector<32x64xf32>
    %c1_24 = arith.constant 1 : index
    %c0_25 = arith.constant 0 : index
    %c0_26 = arith.constant 0 : index
    %70 = vector.load %arg4[%c1_24, %c0_25, %c0_26] : memref<2x32x64xf32, #tpu.memory_space<vmem>>, vector<1x32x64xf32>
    %71 = vector.shape_cast %70 : vector<1x32x64xf32> to vector<32x64xf32>
    %72 = vector.shape_cast %69 : vector<32x64xf32> to vector<1x32x64xf32>
    tpu.vector_store %arg4[%c1_24, %c0_25, %c0_26], %72 {strides = array<i32>} : memref<2x32x64xf32, #tpu.memory_space<vmem>>, vector<1x32x64xf32>,
    return
  }
}

</mosaic_0001>

<llo_original>
// kernel: rpe_attention.1
$region0: #{rpe_attention.1}
  #allocation0 [shape = 'u32[]', space=smem, size = 0x4, offset = 0x4, fixed_abs, tag = 'smem constant byte address 0x4 - core index']
  #allocation1 [shape = 'u32[72,128]{1,0:T(1,128)}', space=vmem, size = 0x9000, scoped, tag = 'internal scratch']
  %s0 = inlined_call_operand.vmem [shape: f32[2,32,64], index: 0, kind: input, shape index: {}]
  %s1 = inlined_call_operand.vmem [shape: f32[96,32], index: 1, kind: input, shape index: {}]
  %s2 = inlined_call_operand.vmem [shape: f32[32,32], index: 2, kind: input, shape index: {}]
  %s3 = inlined_call_operand.vmem [shape: f32[32,1], index: 3, kind: input, shape index: {}]
  %s4 = inlined_call_operand.vmem [shape: f32[2,32,64], index: 4, kind: output, shape index: {}]
  %s5 = sld [smem:[#allocation0]]
  $region26: #{rpe_attention.1} parent=0
    _
  %s7 = ssub.s32 1, %s5
  %s8 = scalar_select 0, %s7, %s5
  // Predicated region
  $region2: #{rpe_attention.1} parent=0 // pred_check
    _
  $region3: #{rpe_attention.1} parent=0 // pred_check_branch
    %10 = sbr.rel (0) target = $region5
  $region4: #{rpe_attention.1} parent=0 // pred_region
    _
  $region5: #{rpe_attention.1} parent=0 // pred_fallthru
    _
  // Predicated region
  $region6: #{rpe_attention.1} parent=0 // pred_check
    _
  $region7: #{rpe_attention.1} parent=0 // pred_check_branch
    %12 = sbr.rel (0) target = $region9
  $region8: #{rpe_attention.1} parent=0 // pred_region
    _
  $region9: #{rpe_attention.1} parent=0 // pred_fallthru
    _
  // Predicated region
  $region10: #{rpe_attention.1} parent=0 // pred_check
    _
  $region11: #{rpe_attention.1} parent=0 // pred_check_branch
    %14 = sbr.rel (0) target = $region13
  $region12: #{rpe_attention.1} parent=0 // pred_region
    _
  $region13: #{rpe_attention.1} parent=0 // pred_fallthru
    _
  // Predicated region
  $region14: #{rpe_attention.1} parent=0 // pred_check
    _
  $region15: #{rpe_attention.1} parent=0 // pred_check_branch
    %16 = sbr.rel (0) target = $region17
  $region16: #{rpe_attention.1} parent=0 // pred_region
    _
  $region17: #{rpe_attention.1} parent=0 // pred_fallthru
    _
  %v18 = vld [vmem:[%s1] sm:$0xff]
  %v19 = vld [vmem:[%s1 + $0x8] sm:$0xff]
  %v20 = vld [vmem:[%s1 + $0x10] sm:$0xff]
  %v21 = vld [vmem:[%s1 + $0x18] sm:$0xff]
  %v22 = vld [vmem:[%s1 + $0x20] sm:$0xff]
  %v23 = vld [vmem:[%s1 + $0x28] sm:$0xff]
  %v24 = vld [vmem:[%s1 + $0x30] sm:$0xff]
  %v25 = vld [vmem:[%s1 + $0x38] sm:$0xff]
  %v26 = vld [vmem:[%s1 + $0x40] sm:$0xff]
  %v27 = vld [vmem:[%s1 + $0x48] sm:$0xff]
  %v28 = vld [vmem:[%s1 + $0x50] sm:$0xff]
  %v29 = vld [vmem:[%s1 + $0x58] sm:$0xff]
  %v30 = vpack.c.bf16 %v19, %v18
  %v31 = vpack.c.bf16 %v21, %v20
  %v32 = vpack.c.bf16 %v23, %v22
  %v33 = vpack.c.bf16 %v25, %v24
  %v34 = vpack.c.bf16 %v27, %v26
  %v35 = vpack.c.bf16 %v29, %v28
  %v36 = vld [vmem:[%s2] sm:$0xff]
  %v37 = vld [vmem:[%s2 + $0x8] sm:$0xff]
  %v38 = vld [vmem:[%s2 + $0x10] sm:$0xff]
  %v39 = vld [vmem:[%s2 + $0x18] sm:$0xff]
  %v40 = vpack.c.bf16 %v37, %v36
  %v41 = vpack.c.bf16 %v39, %v38
  %v42 = vld [vmem:[%s3] sm:$0xff]
  %v43 = vld [vmem:[%s3 + $0x8] sm:$0xff]
  %v44 = vld [vmem:[%s3 + $0x10] sm:$0xff]
  %v45 = vld [vmem:[%s3 + $0x18] sm:$0xff]
  %v46 = vld [vmem:[%s0] sm:$0xff]
  %v47 = vld [vmem:[%s0 + $0x8] sm:$0xff]
  %v48 = vld [vmem:[%s0 + $0x10] sm:$0xff]
  %v49 = vld [vmem:[%s0 + $0x18] sm:$0xff]
  %v50 = vpack.c.bf16 %v47, %v46
  %v51 = vpack.c.bf16 %v49, %v48
  %vm52 = vcmask 261120
  %v54 = vsel %vm52, %v30, 0
  %v57 = vsel %vm52, %v31, 0
  %v60 = vsel %vm52, %v32, 0
  %v63 = vsel %vm52, %v33, 0
  %v66 = vsel %vm52, %v34, 0
  %v69 = vsel %vm52, %v35, 0
  %71 = vmatpush.bf16.msra.mxu0 0
  %72 = vmatpush.bf16.msra.mxu0 0
  %73 = vmatpush.bf16.msra.mxu0 0
  %74 = vmatpush.bf16.msra.mxu0 0
  %75 = vmatpush.bf16.msra.mxu0 0
  %76 = vmatpush.bf16.msra.mxu0 0
  %77 = vmatpush.bf16.msra.mxu0 %v51
  %78 = vmatpush.bf16.msra.mxu0 %v50
  %79 = vmatmul.bf16.gmra.mxu0 %v54
  %v80 = vpop.f32.mrf.mxu0
  %v81 = vadd.f32 0.0, %v80
  %v82 = vpop.f32.mrf.mxu0
  %v83 = vadd.f32 0.0, %v82
  %84 = vmatmul.bf16.gmra.mxu0 %v57
  %v85 = vpop.f32.mrf.mxu0
  %v86 = vadd.f32 0.0, %v85
  %v87 = vpop.f32.mrf.mxu0
  %v88 = vadd.f32 0.0, %v87
  %89 = vmatmul.bf16.gmra.mxu0 %v60
  %v90 = vpop.f32.mrf.mxu0
  %v91 = vadd.f32 0.0, %v90
  %v92 = vpop.f32.mrf.mxu0
  %v93 = vadd.f32 0.0, %v92
  %94 = vmatmul.bf16.gmra.mxu0 %v63
  %v95 = vpop.f32.mrf.mxu0
  %v96 = vadd.f32 0.0, %v95
  %v97 = vpop.f32.mrf.mxu0
  %v98 = vadd.f32 0.0, %v97
  %99 = vmatmul.bf16.gmra.mxu0 %v66
  %v100 = vpop.f32.mrf.mxu0
  %v101 = vadd.f32 0.0, %v100
  %v102 = vpop.f32.mrf.mxu0
  %v103 = vadd.f32 0.0, %v102
  %104 = vmatmul.bf16.gmra.mxu0 %v69
  %v105 = vpop.f32.mrf.mxu0
  %v106 = vadd.f32 0.0, %v105
  %v107 = vpop.f32.mrf.mxu0
  %v108 = vadd.f32 0.0, %v107
  %109 = vdwg.mxu0
  %v110 = vpack.c.bf16 %v81, %v81
  %v111 = vpack.c.bf16 %v83, %v83
  %v112 = vpack.c.bf16 %v86, %v86
  %v113 = vpack.c.bf16 %v88, %v88
  %v114 = vpack.c.bf16 %v91, %v91
  %v115 = vpack.c.bf16 %v93, %v93
  %v116 = vpack.c.bf16 %v96, %v96
  %v117 = vpack.c.bf16 %v98, %v98
  %v118 = vpack.c.bf16 %v101, %v101
  %v119 = vpack.c.bf16 %v103, %v103
  %v120 = vpack.c.bf16 %v106, %v106
  %v121 = vpack.c.bf16 %v108, %v108
  %122 = vxpose.xlu0.c.b16.start [1/8] %v114, 128
  %123 = vxpose.xlu0.c.b16.cont [2/8] 0, 128
  %124 = vxpose.xlu0.c.b16.cont [3/8] 0, 128
  %125 = vxpose.xlu0.c.b16.cont [4/8] 0, 128
  %126 = vxpose.xlu0.c.b16.cont [5/8] 0, 128
  %127 = vxpose.xlu0.c.b16.cont [6/8] 0, 128
  %128 = vxpose.xlu0.c.b16.cont [7/8] 0, 128
  %129 = vxpose.xlu0.c.b16.end [8/8] 0, 128
  %v130 = vpop.trf.xlu0
  %v131 = vpop.trf.xlu0
  %v132 = vpop.trf.xlu0
  %v133 = vpop.trf.xlu0
  %v134 = vpop.trf.xlu0
  %v135 = vpop.trf.xlu0
  %v136 = vpop.trf.xlu0
  %v137 = vpop.trf.xlu0
  %vm138 = vcmask 64512
  %v140 = vsel %vm138, %v130, 0
  %v143 = vsel %vm138, %v131, 0
  %v146 = vsel %vm138, %v132, 0
  %v149 = vsel %vm138, %v133, 0
  %vm151 = vcmask 1043456
  %v153 = vsel %vm151, %v110, 0
  %155 = vmatpush.bf16.msra.mxu0 0
  %156 = vmatpush.bf16.msra.mxu0 0
  %157 = vmatpush.bf16.msra.mxu0 0
  %158 = vmatpush.bf16.msra.mxu0 0
  %159 = vmatpush.bf16.msra.mxu0 0
  %160 = vmatpush.bf16.msra.mxu0 0
  %161 = vmatpush.bf16.msra.mxu0 0
  %162 = vmatpush.bf16.msra.mxu0 %v153
  %163 = vmatmul.bf16.gmra.mxu0 %v140
  %v164 = vpop.f32.mrf.mxu0
  %v165 = vadd.f32 0.0, %v164
  %v166 = vpop.f32.mrf.mxu0
  %v167 = vadd.f32 0.0, %v166
  %168 = vmatmul.bf16.gmra.mxu0 %v143
  %v169 = vpop.f32.mrf.mxu0
  %v170 = vadd.f32 0.0, %v169
  %v171 = vpop.f32.mrf.mxu0
  %v172 = vadd.f32 0.0, %v171
  %173 = vmatmul.bf16.gmra.mxu0 %v146
  %v174 = vpop.f32.mrf.mxu0
  %v175 = vadd.f32 0.0, %v174
  %v176 = vpop.f32.mrf.mxu0
  %v177 = vadd.f32 0.0, %v176
  %178 = vmatmul.bf16.gmra.mxu0 %v149
  %v179 = vpop.f32.mrf.mxu0
  %v180 = vadd.f32 0.0, %v179
  %v181 = vpop.f32.mrf.mxu0
  %v182 = vadd.f32 0.0, %v181
  %183 = vdwg.mxu0
  %184 = vxpose.xlu0.c.b16.start [1/8] %v115, 128
  %185 = vxpose.xlu0.c.b16.cont [2/8] 0, 128
  %186 = vxpose.xlu0.c.b16.cont [3/8] 0, 128
  %187 = vxpose.xlu0.c.b16.cont [4/8] 0, 128
  %188 = vxpose.xlu0.c.b16.cont [5/8] 0, 128
  %189 = vxpose.xlu0.c.b16.cont [6/8] 0, 128
  %190 = vxpose.xlu0.c.b16.cont [7/8] 0, 128
  %191 = vxpose.xlu0.c.b16.end [8/8] 0, 128
  %v192 = vpop.trf.xlu0
  %v193 = vpop.trf.xlu0
  %v194 = vpop.trf.xlu0
  %v195 = vpop.trf.xlu0
  %v196 = vpop.trf.xlu0
  %v197 = vpop.trf.xlu0
  %v198 = vpop.trf.xlu0
  %v199 = vpop.trf.xlu0
  %v201 = vsel %vm138, %v192, 0
  %v204 = vsel %vm138, %v193, 0
  %v207 = vsel %vm138, %v194, 0
  %v210 = vsel %vm138, %v195, 0
  %v213 = vsel %vm151, %v111, 0
  %215 = vmatpush.bf16.msra.mxu0 0
  %216 = vmatpush.bf16.msra.mxu0 0
  %217 = vmatpush.bf16.msra.mxu0 0
  %218 = vmatpush.bf16.msra.mxu0 0
  %219 = vmatpush.bf16.msra.mxu0 0
  %220 = vmatpush.bf16.msra.mxu0 0
  %221 = vmatpush.bf16.msra.mxu0 0
  %222 = vmatpush.bf16.msra.mxu0 %v213
  %223 = vmatmul.bf16.gmra.mxu0 %v201
  %v224 = vpop.f32.mrf.mxu0
  %v225 = vadd.f32 0.0, %v224
  %v226 = vpop.f32.mrf.mxu0
  %v227 = vadd.f32 0.0, %v226
  %228 = vmatmul.bf16.gmra.mxu0 %v204
  %v229 = vpop.f32.mrf.mxu0
  %v230 = vadd.f32 0.0, %v229
  %v231 = vpop.f32.mrf.mxu0
  %v232 = vadd.f32 0.0, %v231
  %233 = vmatmul.bf16.gmra.mxu0 %v207
  %v234 = vpop.f32.mrf.mxu0
  %v235 = vadd.f32 0.0, %v234
  %v236 = vpop.f32.mrf.mxu0
  %v237 = vadd.f32 0.0, %v236
  %238 = vmatmul.bf16.gmra.mxu0 %v210
  %v239 = vpop.f32.mrf.mxu0
  %v240 = vadd.f32 0.0, %v239
  %v241 = vpop.f32.mrf.mxu0
  %v242 = vadd.f32 0.0, %v241
  %243 = vdwg.mxu0
  %244 = vxpose.xlu0.c.b16.start [1/8] %v116, 128
  %245 = vxpose.xlu0.c.b16.cont [2/8] 0, 128
  %246 = vxpose.xlu0.c.b16.cont [3/8] 0, 128
  %247 = vxpose.xlu0.c.b16.cont [4/8] 0, 128
  %248 = vxpose.xlu0.c.b16.cont [5/8] 0, 128
  %249 = vxpose.xlu0.c.b16.cont [6/8] 0, 128
  %250 = vxpose.xlu0.c.b16.cont [7/8] 0, 128
  %251 = vxpose.xlu0.c.b16.end [8/8] 0, 128
  %v252 = vpop.trf.xlu0
  %v253 = vpop.trf.xlu0
  %v254 = vpop.trf.xlu0
  %v255 = vpop.trf.xlu0
  %v256 = vpop.trf.xlu0
  %v257 = vpop.trf.xlu0
  %v258 = vpop.trf.xlu0
  %v259 = vpop.trf.xlu0
  %v261 = vsel %vm138, %v252, 0
  %v264 = vsel %vm138, %v253, 0
  %v267 = vsel %vm138, %v254, 0
  %v270 = vsel %vm138, %v255, 0
  %v273 = vsel %vm151, %v112, 0
  %275 = vmatpush.bf16.msra.mxu0 0
  %276 = vmatpush.bf16.msra.mxu0 0
  %277 = vmatpush.bf16.msra.mxu0 0
  %278 = vmatpush.bf16.msra.mxu0 0
  %279 = vmatpush.bf16.msra.mxu0 0
  %280 = vmatpush.bf16.msra.mxu0 0
  %281 = vmatpush.bf16.msra.mxu0 0
  %282 = vmatpush.bf16.msra.mxu0 %v273
  %283 = vmatmul.bf16.gmra.mxu0 %v261
  %v284 = vpop.f32.mrf.mxu0
  %v285 = vadd.f32 0.0, %v284
  %v286 = vpop.f32.mrf.mxu0
  %v287 = vadd.f32 0.0, %v286
  %288 = vmatmul.bf16.gmra.mxu0 %v264
  %v289 = vpop.f32.mrf.mxu0
  %v290 = vadd.f32 0.0, %v289
  %v291 = vpop.f32.mrf.mxu0
  %v292 = vadd.f32 0.0, %v291
  %293 = vmatmul.bf16.gmra.mxu0 %v267
  %v294 = vpop.f32.mrf.mxu0
  %v295 = vadd.f32 0.0, %v294
  %v296 = vpop.f32.mrf.mxu0
  %v297 = vadd.f32 0.0, %v296
  %298 = vmatmul.bf16.gmra.mxu0 %v270
  %v299 = vpop.f32.mrf.mxu0
  %v300 = vadd.f32 0.0, %v299
  %v301 = vpop.f32.mrf.mxu0
  %v302 = vadd.f32 0.0, %v301
  %303 = vdwg.mxu0
  %304 = vxpose.xlu0.c.b16.start [1/8] %v117, 128
  %305 = vxpose.xlu0.c.b16.cont [2/8] 0, 128
  %306 = vxpose.xlu0.c.b16.cont [3/8] 0, 128
  %307 = vxpose.xlu0.c.b16.cont [4/8] 0, 128
  %308 = vxpose.xlu0.c.b16.cont [5/8] 0, 128
  %309 = vxpose.xlu0.c.b16.cont [6/8] 0, 128
  %310 = vxpose.xlu0.c.b16.cont [7/8] 0, 128
  %311 = vxpose.xlu0.c.b16.end [8/8] 0, 128
  %v312 = vpop.trf.xlu0
  %v313 = vpop.trf.xlu0
  %v314 = vpop.trf.xlu0
  %v315 = vpop.trf.xlu0
  %v316 = vpop.trf.xlu0
  %v317 = vpop.trf.xlu0
  %v318 = vpop.trf.xlu0
  %v319 = vpop.trf.xlu0
  %v321 = vsel %vm138, %v312, 0
  %v324 = vsel %vm138, %v313, 0
  %v327 = vsel %vm138, %v314, 0
  %v330 = vsel %vm138, %v315, 0
  %v333 = vsel %vm151, %v113, 0
  %335 = vmatpush.bf16.msra.mxu0 0
  %336 = vmatpush.bf16.msra.mxu0 0
  %337 = vmatpush.bf16.msra.mxu0 0
  %338 = vmatpush.bf16.msra.mxu0 0
  %339 = vmatpush.bf16.msra.mxu0 0
  %340 = vmatpush.bf16.msra.mxu0 0
  %341 = vmatpush.bf16.msra.mxu0 0
  %342 = vmatpush.bf16.msra.mxu0 %v333
  %343 = vmatmul.bf16.gmra.mxu0 %v321
  %v344 = vpop.f32.mrf.mxu0
  %v345 = vadd.f32 0.0, %v344
  %v346 = vpop.f32.mrf.mxu0
  %v347 = vadd.f32 0.0, %v346
  %348 = vmatmul.bf16.gmra.mxu0 %v324
  %v349 = vpop.f32.mrf.mxu0
  %v350 = vadd.f32 0.0, %v349
  %v351 = vpop.f32.mrf.mxu0
  %v352 = vadd.f32 0.0, %v351
  %353 = vmatmul.bf16.gmra.mxu0 %v327
  %v354 = vpop.f32.mrf.mxu0
  %v355 = vadd.f32 0.0, %v354
  %v356 = vpop.f32.mrf.mxu0
  %v357 = vadd.f32 0.0, %v356
  %358 = vmatmul.bf16.gmra.mxu0 %v330
  %v359 = vpop.f32.mrf.mxu0
  %v360 = vadd.f32 0.0, %v359
  %v361 = vpop.f32.mrf.mxu0
  %v362 = vadd.f32 0.0, %v361
  %363 = vdwg.mxu0
  %vm364 = vcmask 523264
  %v365 = vsel %vm364, %v165, -inf
  %v366 = vsel %vm364, %v167, -inf
  %v367 = vmax.f32 %v365, %v366
  %v368 = vsel %vm364, %v170, -inf
  %v369 = vmax.f32 %v367, %v368
  %v370 = vsel %vm364, %v172, -inf
  %v371 = vmax.f32 %v369, %v370
  %v372 = vsel %vm364, %v175, -inf
  %v373 = vmax.f32 %v371, %v372
  %v374 = vsel %vm364, %v177, -inf
  %v375 = vmax.f32 %v373, %v374
  %v376 = vsel %vm364, %v180, -inf
  %v377 = vmax.f32 %v375, %v376
  %v378 = vsel %vm364, %v182, -inf
  %v379 = vmax.f32 %v377, %v378
  %v380 = vrot.slane %v379, 4
  %v381 = vmax.f32 %v379, %v380
  %v382 = vrot.slane %v381, 2
  %v383 = vmax.f32 %v381, %v382
  %v384 = vrot.slane %v383, 1
  %v385 = vmax.f32 %v383, %v384
  %v386 = vsel %vm364, %v225, -inf
  %v387 = vsel %vm364, %v227, -inf
  %v388 = vmax.f32 %v386, %v387
  %v389 = vsel %vm364, %v230, -inf
  %v390 = vmax.f32 %v388, %v389
  %v391 = vsel %vm364, %v232, -inf
  %v392 = vmax.f32 %v390, %v391
  %v393 = vsel %vm364, %v235, -inf
  %v394 = vmax.f32 %v392, %v393
  %v395 = vsel %vm364, %v237, -inf
  %v396 = vmax.f32 %v394, %v395
  %v397 = vsel %vm364, %v240, -inf
  %v398 = vmax.f32 %v396, %v397
  %v399 = vsel %vm364, %v242, -inf
  %v400 = vmax.f32 %v398, %v399
  %v401 = vrot.slane %v400, 4
  %v402 = vmax.f32 %v400, %v401
  %v403 = vrot.slane %v402, 2
  %v404 = vmax.f32 %v402, %v403
  %v405 = vrot.slane %v404, 1
  %v406 = vmax.f32 %v404, %v405
  %v407 = vsel %vm364, %v285, -inf
  %v408 = vsel %vm364, %v287, -inf
  %v409 = vmax.f32 %v407, %v408
  %v410 = vsel %vm364, %v290, -inf
  %v411 = vmax.f32 %v409, %v410
  %v412 = vsel %vm364, %v292, -inf
  %v413 = vmax.f32 %v411, %v412
  %v414 = vsel %vm364, %v295, -inf
  %v415 = vmax.f32 %v413, %v414
  %v416 = vsel %vm364, %v297, -inf
  %v417 = vmax.f32 %v415, %v416
  %v418 = vsel %vm364, %v300, -inf
  %v419 = vmax.f32 %v417, %v418
  %v420 = vsel %vm364, %v302, -inf
  %v421 = vmax.f32 %v419, %v420
  %v422 = vrot.slane %v421, 4
  %v423 = vmax.f32 %v421, %v422
  %v424 = vrot.slane %v423, 2
  %v425 = vmax.f32 %v423, %v424
  %v426 = vrot.slane %v425, 1
  %v427 = vmax.f32 %v425, %v426
  %v428 = vsel %vm364, %v345, -inf
  %v429 = vsel %vm364, %v347, -inf
  %v430 = vmax.f32 %v428, %v429
  %v431 = vsel %vm364, %v350, -inf
  %v432 = vmax.f32 %v430, %v431
  %v433 = vsel %vm364, %v352, -inf
  %v434 = vmax.f32 %v432, %v433
  %v435 = vsel %vm364, %v355, -inf
  %v436 = vmax.f32 %v434, %v435
  %v437 = vsel %vm364, %v357, -inf
  %v438 = vmax.f32 %v436, %v437
  %v439 = vsel %vm364, %v360, -inf
  %v440 = vmax.f32 %v438, %v439
  %v441 = vsel %vm364, %v362, -inf
  %v442 = vmax.f32 %v440, %v441
  %v443 = vrot.slane %v442, 4
  %v444 = vmax.f32 %v442, %v443
  %v445 = vrot.slane %v444, 2
  %v446 = vmax.f32 %v444, %v445
  %v447 = vrot.slane %v446, 1
  %v448 = vmax.f32 %v446, %v447
  %v449 = vsub.f32 %v165, %v385
  %v450 = vsub.f32 %v167, %v385
  %v451 = vsub.f32 %v170, %v385
  %v452 = vsub.f32 %v172, %v385
  %v453 = vsub.f32 %v175, %v385
  %v454 = vsub.f32 %v177, %v385
  %v455 = vsub.f32 %v180, %v385
  %v456 = vsub.f32 %v182, %v385
  %v457 = vsub.f32 %v225, %v406
  %v458 = vsub.f32 %v227, %v406
  %v459 = vsub.f32 %v230, %v406
  %v460 = vsub.f32 %v232, %v406
  %v461 = vsub.f32 %v235, %v406
  %v462 = vsub.f32 %v237, %v406
  %v463 = vsub.f32 %v240, %v406
  %v464 = vsub.f32 %v242, %v406
  %v465 = vsub.f32 %v285, %v427
  %v466 = vsub.f32 %v287, %v427
  %v467 = vsub.f32 %v290, %v427
  %v468 = vsub.f32 %v292, %v427
  %v469 = vsub.f32 %v295, %v427
  %v470 = vsub.f32 %v297, %v427
  %v471 = vsub.f32 %v300, %v427
  %v472 = vsub.f32 %v302, %v427
  %v473 = vsub.f32 %v345, %v448
  %v474 = vsub.f32 %v347, %v448
  %v475 = vsub.f32 %v350, %v448
  %v476 = vsub.f32 %v352, %v448
  %v477 = vsub.f32 %v355, %v448
  %v478 = vsub.f32 %v357, %v448
  %v479 = vsub.f32 %v360, %v448
  %v480 = vsub.f32 %v362, %v448
  %v481 = vmul.f32 %v449, 1.442695
  %v482 = vpow.pop %v481
  %v483 = vmul.f32 %v450, 1.442695
  %v484 = vpow.pop %v483
  %v485 = vmul.f32 %v451, 1.442695
  %v486 = vpow.pop %v485
  %v487 = vmul.f32 %v452, 1.442695
  %v488 = vpow.pop %v487
  %v489 = vmul.f32 %v453, 1.442695
  %v490 = vpow.pop %v489
  %v491 = vmul.f32 %v454, 1.442695
  %v492 = vpow.pop %v491
  %v493 = vmul.f32 %v455, 1.442695
  %v494 = vpow.pop %v493
  %v495 = vmul.f32 %v456, 1.442695
  %v496 = vpow.pop %v495
  %v497 = vmul.f32 %v457, 1.442695
  %v498 = vpow.pop %v497
  %v499 = vmul.f32 %v458, 1.442695
  %v500 = vpow.pop %v499
  %v501 = vmul.f32 %v459, 1.442695
  %v502 = vpow.pop %v501
  %v503 = vmul.f32 %v460, 1.442695
  %v504 = vpow.pop %v503
  %v505 = vmul.f32 %v461, 1.442695
  %v506 = vpow.pop %v505
  %v507 = vmul.f32 %v462, 1.442695
  %v508 = vpow.pop %v507
  %v509 = vmul.f32 %v463, 1.442695
  %v510 = vpow.pop %v509
  %v511 = vmul.f32 %v464, 1.442695
  %v512 = vpow.pop %v511
  %v513 = vmul.f32 %v465, 1.442695
  %v514 = vpow.pop %v513
  %v515 = vmul.f32 %v466, 1.442695
  %v516 = vpow.pop %v515
  %v517 = vmul.f32 %v467, 1.442695
  %v518 = vpow.pop %v517
  %v519 = vmul.f32 %v468, 1.442695
  %v520 = vpow.pop %v519
  %v521 = vmul.f32 %v469, 1.442695
  %v522 = vpow.pop %v521
  %v523 = vmul.f32 %v470, 1.442695
  %v524 = vpow.pop %v523
  %v525 = vmul.f32 %v471, 1.442695
  %v526 = vpow.pop %v525
  %v527 = vmul.f32 %v472, 1.442695
  %v528 = vpow.pop %v527
  %v529 = vmul.f32 %v473, 1.442695
  %v530 = vpow.pop %v529
  %v531 = vmul.f32 %v474, 1.442695
  %v532 = vpow.pop %v531
  %v533 = vmul.f32 %v475, 1.442695
  %v534 = vpow.pop %v533
  %v535 = vmul.f32 %v476, 1.442695
  %v536 = vpow.pop %v535
  %v537 = vmul.f32 %v477, 1.442695
  %v538 = vpow.pop %v537
  %v539 = vmul.f32 %v478, 1.442695
  %v540 = vpow.pop %v539
  %v541 = vmul.f32 %v479, 1.442695
  %v542 = vpow.pop %v541
  %v543 = vmul.f32 %v480, 1.442695
  %v544 = vpow.pop %v543
  %v545 = vsel %vm364, %v482, 0.0
  %v546 = vsel %vm364, %v484, 0.0
  %v547 = vadd.f32 %v545, %v546
  %v548 = vsel %vm364, %v486, 0.0
  %v549 = vadd.f32 %v547, %v548
  %v550 = vsel %vm364, %v488, 0.0
  %v551 = vadd.f32 %v549, %v550
  %v552 = vsel %vm364, %v490, 0.0
  %v553 = vadd.f32 %v551, %v552
  %v554 = vsel %vm364, %v492, 0.0
  %v555 = vadd.f32 %v553, %v554
  %v556 = vsel %vm364, %v494, 0.0
  %v557 = vadd.f32 %v555, %v556
  %v558 = vsel %vm364, %v496, 0.0
  %v559 = vadd.f32 %v557, %v558
  %v560 = vrot.slane %v559, 4
  %v561 = vadd.f32 %v559, %v560
  %v562 = vrot.slane %v561, 2
  %v563 = vadd.f32 %v561, %v562
  %v564 = vrot.slane %v563, 1
  %v565 = vadd.f32 %v563, %v564
  %v566 = vsel %vm364, %v498, 0.0
  %v567 = vsel %vm364, %v500, 0.0
  %v568 = vadd.f32 %v566, %v567
  %v569 = vsel %vm364, %v502, 0.0
  %v570 = vadd.f32 %v568, %v569
  %v571 = vsel %vm364, %v504, 0.0
  %v572 = vadd.f32 %v570, %v571
  %v573 = vsel %vm364, %v506, 0.0
  %v574 = vadd.f32 %v572, %v573
  %v575 = vsel %vm364, %v508, 0.0
  %v576 = vadd.f32 %v574, %v575
  %v577 = vsel %vm364, %v510, 0.0
  %v578 = vadd.f32 %v576, %v577
  %v579 = vsel %vm364, %v512, 0.0
  %v580 = vadd.f32 %v578, %v579
  %v581 = vrot.slane %v580, 4
  %v582 = vadd.f32 %v580, %v581
  %v583 = vrot.slane %v582, 2
  %v584 = vadd.f32 %v582, %v583
  %v585 = vrot.slane %v584, 1
  %v586 = vadd.f32 %v584, %v585
  %v587 = vsel %vm364, %v514, 0.0
  %v588 = vsel %vm364, %v516, 0.0
  %v589 = vadd.f32 %v587, %v588
  %v590 = vsel %vm364, %v518, 0.0
  %v591 = vadd.f32 %v589, %v590
  %v592 = vsel %vm364, %v520, 0.0
  %v593 = vadd.f32 %v591, %v592
  %v594 = vsel %vm364, %v522, 0.0
  %v595 = vadd.f32 %v593, %v594
  %v596 = vsel %vm364, %v524, 0.0
  %v597 = vadd.f32 %v595, %v596
  %v598 = vsel %vm364, %v526, 0.0
  %v599 = vadd.f32 %v597, %v598
  %v600 = vsel %vm364, %v528, 0.0
  %v601 = vadd.f32 %v599, %v600
  %v602 = vrot.slane %v601, 4
  %v603 = vadd.f32 %v601, %v602
  %v604 = vrot.slane %v603, 2
  %v605 = vadd.f32 %v603, %v604
  %v606 = vrot.slane %v605, 1
  %v607 = vadd.f32 %v605, %v606
  %v608 = vsel %vm364, %v530, 0.0
  %v609 = vsel %vm364, %v532, 0.0
  %v610 = vadd.f32 %v608, %v609
  %v611 = vsel %vm364, %v534, 0.0
  %v612 = vadd.f32 %v610, %v611
  %v613 = vsel %vm364, %v536, 0.0
  %v614 = vadd.f32 %v612, %v613
  %v615 = vsel %vm364, %v538, 0.0
  %v616 = vadd.f32 %v614, %v615
  %v617 = vsel %vm364, %v540, 0.0
  %v618 = vadd.f32 %v616, %v617
  %v619 = vsel %vm364, %v542, 0.0
  %v620 = vadd.f32 %v618, %v619
  %v621 = vsel %vm364, %v544, 0.0
  %v622 = vadd.f32 %v620, %v621
  %v623 = vrot.slane %v622, 4
  %v624 = vadd.f32 %v622, %v623
  %v625 = vrot.slane %v624, 2
  %v626 = vadd.f32 %v624, %v625
  %v627 = vrot.slane %v626, 1
  %v628 = vadd.f32 %v626, %v627
  %v629 = vrcp.pop %v565
  %v630 = vrcp.pop %v586
  %v631 = vrcp.pop %v607
  %v632 = vrcp.pop %v628
  %v633 = vmul.f32 %v482, %v629
  %v634 = vmul.f32 %v484, %v629
  %v635 = vmul.f32 %v486, %v629
  %v636 = vmul.f32 %v488, %v629
  %v637 = vmul.f32 %v490, %v629
  %v638 = vmul.f32 %v492, %v629
  %v639 = vmul.f32 %v494, %v629
  %v640 = vmul.f32 %v496, %v629
  %v641 = vmul.f32 %v498, %v630
  %v642 = vmul.f32 %v500, %v630
  %v643 = vmul.f32 %v502, %v630
  %v644 = vmul.f32 %v504, %v630
  %v645 = vmul.f32 %v506, %v630
  %v646 = vmul.f32 %v508, %v630
  %v647 = vmul.f32 %v510, %v630
  %v648 = vmul.f32 %v512, %v630
  %v649 = vmul.f32 %v514, %v631
  %v650 = vmul.f32 %v516, %v631
  %v651 = vmul.f32 %v518, %v631
  %v652 = vmul.f32 %v520, %v631
  %v653 = vmul.f32 %v522, %v631
  %v654 = vmul.f32 %v524, %v631
  %v655 = vmul.f32 %v526, %v631
  %v656 = vmul.f32 %v528, %v631
  %v657 = vmul.f32 %v530, %v632
  %v658 = vmul.f32 %v532, %v632
  %v659 = vmul.f32 %v534, %v632
  %v660 = vmul.f32 %v536, %v632
  %v661 = vmul.f32 %v538, %v632
  %v662 = vmul.f32 %v540, %v632
  %v663 = vmul.f32 %v542, %v632
  %v664 = vmul.f32 %v544, %v632
  %v665 = vpack.c.bf16 %v633, %v633
  %v666 = vpack.c.bf16 %v634, %v634
  %v667 = vpack.c.bf16 %v635, %v635
  %v668 = vpack.c.bf16 %v636, %v636
  %v669 = vpack.c.bf16 %v637, %v637
  %v670 = vpack.c.bf16 %v638, %v638
  %v671 = vpack.c.bf16 %v639, %v639
  %v672 = vpack.c.bf16 %v640, %v640
  %v673 = vpack.c.bf16 %v641, %v641
  %v674 = vpack.c.bf16 %v642, %v642
  %v675 = vpack.c.bf16 %v643, %v643
  %v676 = vpack.c.bf16 %v644, %v644
  %v677 = vpack.c.bf16 %v645, %v645
  %v678 = vpack.c.bf16 %v646, %v646
  %v679 = vpack.c.bf16 %v647, %v647
  %v680 = vpack.c.bf16 %v648, %v648
  %v681 = vpack.c.bf16 %v649, %v649
  %v682 = vpack.c.bf16 %v650, %v650
  %v683 = vpack.c.bf16 %v651, %v651
  %v684 = vpack.c.bf16 %v652, %v652
  %v685 = vpack.c.bf16 %v653, %v653
  %v686 = vpack.c.bf16 %v654, %v654
  %v687 = vpack.c.bf16 %v655, %v655
  %v688 = vpack.c.bf16 %v656, %v656
  %v689 = vpack.c.bf16 %v657, %v657
  %v690 = vpack.c.bf16 %v658, %v658
  %v691 = vpack.c.bf16 %v659, %v659
  %v692 = vpack.c.bf16 %v660, %v660
  %v693 = vpack.c.bf16 %v661, %v661
  %v694 = vpack.c.bf16 %v662, %v662
  %v695 = vpack.c.bf16 %v663, %v663
  %v696 = vpack.c.bf16 %v664, %v664
  %v705 = vunpack.c.l.b16 %v665
  %v706 = vunpack.c.l.b16 %v666
  %v707 = vunpack.c.l.b16 %v667
  %v708 = vunpack.c.l.b16 %v668
  %v709 = vunpack.c.l.b16 %v669
  %v710 = vunpack.c.l.b16 %v670
  %v711 = vunpack.c.l.b16 %v671
  %v712 = vunpack.c.l.b16 %v672
  %v713 = vpack.c.b16 %v706, %v705
  %v714 = vpack.c.b16 %v708, %v707
  %v715 = vpack.c.b16 %v710, %v709
  %v716 = vpack.c.b16 %v712, %v711
  %v722 = vsel %vm364, %v118, 0
  %724 = vmatpush.bf16.msra.mxu0 0
  %725 = vmatpush.bf16.msra.mxu0 0
  %726 = vmatpush.bf16.msra.mxu0 0
  %727 = vmatpush.bf16.msra.mxu0 0
  %728 = vmatpush.bf16.msra.mxu0 %v716
  %729 = vmatpush.bf16.msra.mxu0 %v715
  %730 = vmatpush.bf16.msra.mxu0 %v714
  %731 = vmatpush.bf16.msra.mxu0 %v713
  %732 = vmatmul.bf16.gmra.mxu0 %v722
  %v733 = vpop.f32.mrf.mxu0
  %v734 = vadd.f32 0.0, %v733
  %v735 = vpop.f32.mrf.mxu0
  %736 = vdwg.mxu0
  %v745 = vunpack.c.l.b16 %v673
  %v746 = vunpack.c.l.b16 %v674
  %v747 = vunpack.c.l.b16 %v675
  %v748 = vunpack.c.l.b16 %v676
  %v749 = vunpack.c.l.b16 %v677
  %v750 = vunpack.c.l.b16 %v678
  %v751 = vunpack.c.l.b16 %v679
  %v752 = vunpack.c.l.b16 %v680
  %v753 = vpack.c.b16 %v746, %v745
  %v754 = vpack.c.b16 %v748, %v747
  %v755 = vpack.c.b16 %v750, %v749
  %v756 = vpack.c.b16 %v752, %v751
  %v762 = vsel %vm364, %v119, 0
  %764 = vmatpush.bf16.msra.mxu0 0
  %765 = vmatpush.bf16.msra.mxu0 0
  %766 = vmatpush.bf16.msra.mxu0 0
  %767 = vmatpush.bf16.msra.mxu0 0
  %768 = vmatpush.bf16.msra.mxu0 %v756
  %769 = vmatpush.bf16.msra.mxu0 %v755
  %770 = vmatpush.bf16.msra.mxu0 %v754
  %771 = vmatpush.bf16.msra.mxu0 %v753
  %772 = vmatmul.bf16.gmra.mxu0 %v762
  %v773 = vpop.f32.mrf.mxu0
  %v774 = vadd.f32 0.0, %v773
  %v775 = vpop.f32.mrf.mxu0
  %776 = vdwg.mxu0
  %v785 = vunpack.c.l.b16 %v681
  %v786 = vunpack.c.l.b16 %v682
  %v787 = vunpack.c.l.b16 %v683
  %v788 = vunpack.c.l.b16 %v684
  %v789 = vunpack.c.l.b16 %v685
  %v790 = vunpack.c.l.b16 %v686
  %v791 = vunpack.c.l.b16 %v687
  %v792 = vunpack.c.l.b16 %v688
  %v793 = vpack.c.b16 %v786, %v785
  %v794 = vpack.c.b16 %v788, %v787
  %v795 = vpack.c.b16 %v790, %v789
  %v796 = vpack.c.b16 %v792, %v791
  %v802 = vsel %vm364, %v120, 0
  %804 = vmatpush.bf16.msra.mxu0 0
  %805 = vmatpush.bf16.msra.mxu0 0
  %806 = vmatpush.bf16.msra.mxu0 0
  %807 = vmatpush.bf16.msra.mxu0 0
  %808 = vmatpush.bf16.msra.mxu0 %v796
  %809 = vmatpush.bf16.msra.mxu0 %v795
  %810 = vmatpush.bf16.msra.mxu0 %v794
  %811 = vmatpush.bf16.msra.mxu0 %v793
  %812 = vmatmul.bf16.gmra.mxu0 %v802
  %v813 = vpop.f32.mrf.mxu0
  %v814 = vadd.f32 0.0, %v813
  %v815 = vpop.f32.mrf.mxu0
  %816 = vdwg.mxu0
  %v825 = vunpack.c.l.b16 %v689
  %v826 = vunpack.c.l.b16 %v690
  %v827 = vunpack.c.l.b16 %v691
  %v828 = vunpack.c.l.b16 %v692
  %v829 = vunpack.c.l.b16 %v693
  %v830 = vunpack.c.l.b16 %v694
  %v831 = vunpack.c.l.b16 %v695
  %v832 = vunpack.c.l.b16 %v696
  %v833 = vpack.c.b16 %v826, %v825
  %v834 = vpack.c.b16 %v828, %v827
  %v835 = vpack.c.b16 %v830, %v829
  %v836 = vpack.c.b16 %v832, %v831
  %v842 = vsel %vm364, %v121, 0
  %844 = vmatpush.bf16.msra.mxu0 0
  %845 = vmatpush.bf16.msra.mxu0 0
  %846 = vmatpush.bf16.msra.mxu0 0
  %847 = vmatpush.bf16.msra.mxu0 0
  %848 = vmatpush.bf16.msra.mxu0 %v836
  %849 = vmatpush.bf16.msra.mxu0 %v835
  %850 = vmatpush.bf16.msra.mxu0 %v834
  %851 = vmatpush.bf16.msra.mxu0 %v833
  %852 = vmatmul.bf16.gmra.mxu0 %v842
  %v853 = vpop.f32.mrf.mxu0
  %v854 = vadd.f32 0.0, %v853
  %v855 = vpop.f32.mrf.mxu0
  %856 = vdwg.mxu0
  %v857 = vpack.c.bf16 %v774, %v734
  %v858 = vpack.c.bf16 %v854, %v814
  %860 = vset.pattern.permute.xlu0 0
  %861 = vperm.xlu0 %860, %v42
  %v862 = vpop.permute.xlu0 %861
  %865 = vset.pattern.permute.xlu0 0
  %866 = vperm.xlu0 %865, %v43
  %v867 = vpop.permute.xlu0 %866
  %870 = vset.pattern.permute.xlu0 0
  %871 = vperm.xlu0 %870, %v44
  %v872 = vpop.permute.xlu0 %871
  %875 = vset.pattern.permute.xlu0 0
  %876 = vperm.xlu0 %875, %v45
  %v877 = vpop.permute.xlu0 %876
  %v880 = vsel %vm52, %v40, 0
  %v883 = vsel %vm52, %v41, 0
  %885 = vmatpush.bf16.msra.mxu0 0
  %886 = vmatpush.bf16.msra.mxu0 0
  %887 = vmatpush.bf16.msra.mxu0 0
  %888 = vmatpush.bf16.msra.mxu0 0
  %889 = vmatpush.bf16.msra.mxu0 0
  %890 = vmatpush.bf16.msra.mxu0 0
  %891 = vmatpush.bf16.msra.mxu0 %v858
  %892 = vmatpush.bf16.msra.mxu0 %v857
  %893 = vmatmul.bf16.gmra.mxu0 %v880
  %v894 = vpop.f32.mrf.mxu0
  %v895 = vadd.f32 %v862, %v894
  %v896 = vpop.f32.mrf.mxu0
  %v897 = vadd.f32 %v867, %v896
  %898 = vmatmul.bf16.gmra.mxu0 %v883
  %v899 = vpop.f32.mrf.mxu0
  %v900 = vadd.f32 %v872, %v899
  %v901 = vpop.f32.mrf.mxu0
  %v902 = vadd.f32 %v877, %v901
  %903 = vdwg.mxu0
  %904 = vst.msk [vmem:[%s4] sm:$0xff] %vm364, %v895
  %905 = vst.msk [vmem:[%s4 + $0x8] sm:$0xff] %vm364, %v897
  %906 = vst.msk [vmem:[%s4 + $0x10] sm:$0xff] %vm364, %v900
  %907 = vst.msk [vmem:[%s4 + $0x18] sm:$0xff] %vm364, %v902
  %s908 = scalar_lea.vmem %s0, 32
  %v909 = vld [vmem:[%s908] sm:$0xff]
  %v910 = vld [vmem:[%s908 + $0x8] sm:$0xff]
  %v911 = vld [vmem:[%s908 + $0x10] sm:$0xff]
  %v912 = vld [vmem:[%s908 + $0x18] sm:$0xff]
  %v913 = vpack.c.bf16 %v910, %v909
  %v914 = vpack.c.bf16 %v912, %v911
  %915 = vmatpush.bf16.msra.mxu0 0
  %916 = vmatpush.bf16.msra.mxu0 0
  %917 = vmatpush.bf16.msra.mxu0 0
  %918 = vmatpush.bf16.msra.mxu0 0
  %919 = vmatpush.bf16.msra.mxu0 0
  %920 = vmatpush.bf16.msra.mxu0 0
  %921 = vmatpush.bf16.msra.mxu0 %v914
  %922 = vmatpush.bf16.msra.mxu0 %v913
  %923 = vmatmul.bf16.gmra.mxu0 %v54
  %v924 = vpop.f32.mrf.mxu0
  %v925 = vadd.f32 0.0, %v924
  %v926 = vpop.f32.mrf.mxu0
  %v927 = vadd.f32 0.0, %v926
  %928 = vmatmul.bf16.gmra.mxu0 %v57
  %v929 = vpop.f32.mrf.mxu0
  %v930 = vadd.f32 0.0, %v929
  %v931 = vpop.f32.mrf.mxu0
  %v932 = vadd.f32 0.0, %v931
  %933 = vmatmul.bf16.gmra.mxu0 %v60
  %v934 = vpop.f32.mrf.mxu0
  %v935 = vadd.f32 0.0, %v934
  %v936 = vpop.f32.mrf.mxu0
  %v937 = vadd.f32 0.0, %v936
  %938 = vmatmul.bf16.gmra.mxu0 %v63
  %v939 = vpop.f32.mrf.mxu0
  %v940 = vadd.f32 0.0, %v939
  %v941 = vpop.f32.mrf.mxu0
  %v942 = vadd.f32 0.0, %v941
  %943 = vmatmul.bf16.gmra.mxu0 %v66
  %v944 = vpop.f32.mrf.mxu0
  %v945 = vadd.f32 0.0, %v944
  %v946 = vpop.f32.mrf.mxu0
  %v947 = vadd.f32 0.0, %v946
  %948 = vmatmul.bf16.gmra.mxu0 %v69
  %v949 = vpop.f32.mrf.mxu0
  %v950 = vadd.f32 0.0, %v949
  %v951 = vpop.f32.mrf.mxu0
  %v952 = vadd.f32 0.0, %v951
  %953 = vdwg.mxu0
  %v954 = vpack.c.bf16 %v925, %v925
  %v955 = vpack.c.bf16 %v927, %v927
  %v956 = vpack.c.bf16 %v930, %v930
  %v957 = vpack.c.bf16 %v932, %v932
  %v958 = vpack.c.bf16 %v935, %v935
  %v959 = vpack.c.bf16 %v937, %v937
  %v960 = vpack.c.bf16 %v940, %v940
  %v961 = vpack.c.bf16 %v942, %v942
  %v962 = vpack.c.bf16 %v945, %v945
  %v963 = vpack.c.bf16 %v947, %v947
  %v964 = vpack.c.bf16 %v950, %v950
  %v965 = vpack.c.bf16 %v952, %v952
  %966 = vxpose.xlu0.c.b16.start [1/8] %v958, 128
  %967 = vxpose.xlu0.c.b16.cont [2/8] 0, 128
  %968 = vxpose.xlu0.c.b16.cont [3/8] 0, 128
  %969 = vxpose.xlu0.c.b16.cont [4/8] 0, 128
  %970 = vxpose.xlu0.c.b16.cont [5/8] 0, 128
  %971 = vxpose.xlu0.c.b16.cont [6/8] 0, 128
  %972 = vxpose.xlu0.c.b16.cont [7/8] 0, 128
  %973 = vxpose.xlu0.c.b16.end [8/8] 0, 128
  %v974 = vpop.trf.xlu0
  %v975 = vpop.trf.xlu0
  %v976 = vpop.trf.xlu0
  %v977 = vpop.trf.xlu0
  %v978 = vpop.trf.xlu0
  %v979 = vpop.trf.xlu0
  %v980 = vpop.trf.xlu0
  %v981 = vpop.trf.xlu0
  %v983 = vsel %vm138, %v974, 0
  %v986 = vsel %vm138, %v975, 0
  %v989 = vsel %vm138, %v976, 0
  %v992 = vsel %vm138, %v977, 0
  %v995 = vsel %vm151, %v954, 0
  %997 = vmatpush.bf16.msra.mxu0 0
  %998 = vmatpush.bf16.msra.mxu0 0
  %999 = vmatpush.bf16.msra.mxu0 0
  %1000 = vmatpush.bf16.msra.mxu0 0
  %1001 = vmatpush.bf16.msra.mxu0 0
  %1002 = vmatpush.bf16.msra.mxu0 0
  %1003 = vmatpush.bf16.msra.mxu0 0
  %1004 = vmatpush.bf16.msra.mxu0 %v995
  %1005 = vmatmul.bf16.gmra.mxu0 %v983
  %v1006 = vpop.f32.mrf.mxu0
  %v1007 = vadd.f32 0.0, %v1006
  %v1008 = vpop.f32.mrf.mxu0
  %v1009 = vadd.f32 0.0, %v1008
  %1010 = vmatmul.bf16.gmra.mxu0 %v986
  %v1011 = vpop.f32.mrf.mxu0
  %v1012 = vadd.f32 0.0, %v1011
  %v1013 = vpop.f32.mrf.mxu0
  %v1014 = vadd.f32 0.0, %v1013
  %1015 = vmatmul.bf16.gmra.mxu0 %v989
  %v1016 = vpop.f32.mrf.mxu0
  %v1017 = vadd.f32 0.0, %v1016
  %v1018 = vpop.f32.mrf.mxu0
  %v1019 = vadd.f32 0.0, %v1018
  %1020 = vmatmul.bf16.gmra.mxu0 %v992
  %v1021 = vpop.f32.mrf.mxu0
  %v1022 = vadd.f32 0.0, %v1021
  %v1023 = vpop.f32.mrf.mxu0
  %v1024 = vadd.f32 0.0, %v1023
  %1025 = vdwg.mxu0
  %1026 = vxpose.xlu0.c.b16.start [1/8] %v959, 128
  %1027 = vxpose.xlu0.c.b16.cont [2/8] 0, 128
  %1028 = vxpose.xlu0.c.b16.cont [3/8] 0, 128
  %1029 = vxpose.xlu0.c.b16.cont [4/8] 0, 128
  %1030 = vxpose.xlu0.c.b16.cont [5/8] 0, 128
  %1031 = vxpose.xlu0.c.b16.cont [6/8] 0, 128
  %1032 = vxpose.xlu0.c.b16.cont [7/8] 0, 128
  %1033 = vxpose.xlu0.c.b16.end [8/8] 0, 128
  %v1034 = vpop.trf.xlu0
  %v1035 = vpop.trf.xlu0
  %v1036 = vpop.trf.xlu0
  %v1037 = vpop.trf.xlu0
  %v1038 = vpop.trf.xlu0
  %v1039 = vpop.trf.xlu0
  %v1040 = vpop.trf.xlu0
  %v1041 = vpop.trf.xlu0
  %v1043 = vsel %vm138, %v1034, 0
  %v1046 = vsel %vm138, %v1035, 0
  %v1049 = vsel %vm138, %v1036, 0
  %v1052 = vsel %vm138, %v1037, 0
  %v1055 = vsel %vm151, %v955, 0
  %1057 = vmatpush.bf16.msra.mxu0 0
  %1058 = vmatpush.bf16.msra.mxu0 0
  %1059 = vmatpush.bf16.msra.mxu0 0
  %1060 = vmatpush.bf16.msra.mxu0 0
  %1061 = vmatpush.bf16.msra.mxu0 0
  %1062 = vmatpush.bf16.msra.mxu0 0
  %1063 = vmatpush.bf16.msra.mxu0 0
  %1064 = vmatpush.bf16.msra.mxu0 %v1055
  %1065 = vmatmul.bf16.gmra.mxu0 %v1043
  %v1066 = vpop.f32.mrf.mxu0
  %v1067 = vadd.f32 0.0, %v1066
  %v1068 = vpop.f32.mrf.mxu0
  %v1069 = vadd.f32 0.0, %v1068
  %1070 = vmatmul.bf16.gmra.mxu0 %v1046
  %v1071 = vpop.f32.mrf.mxu0
  %v1072 = vadd.f32 0.0, %v1071
  %v1073 = vpop.f32.mrf.mxu0
  %v1074 = vadd.f32 0.0, %v1073
  %1075 = vmatmul.bf16.gmra.mxu0 %v1049
  %v1076 = vpop.f32.mrf.mxu0
  %v1077 = vadd.f32 0.0, %v1076
  %v1078 = vpop.f32.mrf.mxu0
  %v1079 = vadd.f32 0.0, %v1078
  %1080 = vmatmul.bf16.gmra.mxu0 %v1052
  %v1081 = vpop.f32.mrf.mxu0
  %v1082 = vadd.f32 0.0, %v1081
  %v1083 = vpop.f32.mrf.mxu0
  %v1084 = vadd.f32 0.0, %v1083
  %1085 = vdwg.mxu0
  %1086 = vxpose.xlu0.c.b16.start [1/8] %v960, 128
  %1087 = vxpose.xlu0.c.b16.cont [2/8] 0, 128
  %1088 = vxpose.xlu0.c.b16.cont [3/8] 0, 128
  %1089 = vxpose.xlu0.c.b16.cont [4/8] 0, 128
  %1090 = vxpose.xlu0.c.b16.cont [5/8] 0, 128
  %1091 = vxpose.xlu0.c.b16.cont [6/8] 0, 128
  %1092 = vxpose.xlu0.c.b16.cont [7/8] 0, 128
  %1093 = vxpose.xlu0.c.b16.end [8/8] 0, 128
  %v1094 = vpop.trf.xlu0
  %v1095 = vpop.trf.xlu0
  %v1096 = vpop.trf.xlu0
  %v1097 = vpop.trf.xlu0
  %v1098 = vpop.trf.xlu0
  %v1099 = vpop.trf.xlu0
  %v1100 = vpop.trf.xlu0
  %v1101 = vpop.trf.xlu0
  %v1103 = vsel %vm138, %v1094, 0
  %v1106 = vsel %vm138, %v1095, 0
  %v1109 = vsel %vm138, %v1096, 0
  %v1112 = vsel %vm138, %v1097, 0
  %v1115 = vsel %vm151, %v956, 0
  %1117 = vmatpush.bf16.msra.mxu0 0
  %1118 = vmatpush.bf16.msra.mxu0 0
  %1119 = vmatpush.bf16.msra.mxu0 0
  %1120 = vmatpush.bf16.msra.mxu0 0
  %1121 = vmatpush.bf16.msra.mxu0 0
  %1122 = vmatpush.bf16.msra.mxu0 0
  %1123 = vmatpush.bf16.msra.mxu0 0
  %1124 = vmatpush.bf16.msra.mxu0 %v1115
  %1125 = vmatmul.bf16.gmra.mxu0 %v1103
  %v1126 = vpop.f32.mrf.mxu0
  %v1127 = vadd.f32 0.0, %v1126
  %v1128 = vpop.f32.mrf.mxu0
  %v1129 = vadd.f32 0.0, %v1128
  %1130 = vmatmul.bf16.gmra.mxu0 %v1106
  %v1131 = vpop.f32.mrf.mxu0
  %v1132 = vadd.f32 0.0, %v1131
  %v1133 = vpop.f32.mrf.mxu0
  %v1134 = vadd.f32 0.0, %v1133
  %1135 = vmatmul.bf16.gmra.mxu0 %v1109
  %v1136 = vpop.f32.mrf.mxu0
  %v1137 = vadd.f32 0.0, %v1136
  %v1138 = vpop.f32.mrf.mxu0
  %v1139 = vadd.f32 0.0, %v1138
  %1140 = vmatmul.bf16.gmra.mxu0 %v1112
  %v1141 = vpop.f32.mrf.mxu0
  %v1142 = vadd.f32 0.0, %v1141
  %v1143 = vpop.f32.mrf.mxu0
  %v1144 = vadd.f32 0.0, %v1143
  %1145 = vdwg.mxu0
  %1146 = vxpose.xlu0.c.b16.start [1/8] %v961, 128
  %1147 = vxpose.xlu0.c.b16.cont [2/8] 0, 128
  %1148 = vxpose.xlu0.c.b16.cont [3/8] 0, 128
  %1149 = vxpose.xlu0.c.b16.cont [4/8] 0, 128
  %1150 = vxpose.xlu0.c.b16.cont [5/8] 0, 128
  %1151 = vxpose.xlu0.c.b16.cont [6/8] 0, 128
  %1152 = vxpose.xlu0.c.b16.cont [7/8] 0, 128
  %1153 = vxpose.xlu0.c.b16.end [8/8] 0, 128
  %v1154 = vpop.trf.xlu0
  %v1155 = vpop.trf.xlu0
  %v1156 = vpop.trf.xlu0
  %v1157 = vpop.trf.xlu0
  %v1158 = vpop.trf.xlu0
  %v1159 = vpop.trf.xlu0
  %v1160 = vpop.trf.xlu0
  %v1161 = vpop.trf.xlu0
  %v1163 = vsel %vm138, %v1154, 0
  %v1166 = vsel %vm138, %v1155, 0
  %v1169 = vsel %vm138, %v1156, 0
  %v1172 = vsel %vm138, %v1157, 0
  %v1175 = vsel %vm151, %v957, 0
  %1177 = vmatpush.bf16.msra.mxu0 0
  %1178 = vmatpush.bf16.msra.mxu0 0
  %1179 = vmatpush.bf16.msra.mxu0 0
  %1180 = vmatpush.bf16.msra.mxu0 0
  %1181 = vmatpush.bf16.msra.mxu0 0
  %1182 = vmatpush.bf16.msra.mxu0 0
  %1183 = vmatpush.bf16.msra.mxu0 0
  %1184 = vmatpush.bf16.msra.mxu0 %v1175
  %1185 = vmatmul.bf16.gmra.mxu0 %v1163
  %v1186 = vpop.f32.mrf.mxu0
  %v1187 = vadd.f32 0.0, %v1186
  %v1188 = vpop.f32.mrf.mxu0
  %v1189 = vadd.f32 0.0, %v1188
  %1190 = vmatmul.bf16.gmra.mxu0 %v1166
  %v1191 = vpop.f32.mrf.mxu0
  %v1192 = vadd.f32 0.0, %v1191
  %v1193 = vpop.f32.mrf.mxu0
  %v1194 = vadd.f32 0.0, %v1193
  %1195 = vmatmul.bf16.gmra.mxu0 %v1169
  %v1196 = vpop.f32.mrf.mxu0
  %v1197 = vadd.f32 0.0, %v1196
  %v1198 = vpop.f32.mrf.mxu0
  %v1199 = vadd.f32 0.0, %v1198
  %1200 = vmatmul.bf16.gmra.mxu0 %v1172
  %v1201 = vpop.f32.mrf.mxu0
  %v1202 = vadd.f32 0.0, %v1201
  %v1203 = vpop.f32.mrf.mxu0
  %v1204 = vadd.f32 0.0, %v1203
  %1205 = vdwg.mxu0
  %v1206 = vsel %vm364, %v1007, -inf
  %v1207 = vsel %vm364, %v1009, -inf
  %v1208 = vmax.f32 %v1206, %v1207
  %v1209 = vsel %vm364, %v1012, -inf
  %v1210 = vmax.f32 %v1208, %v1209
  %v1211 = vsel %vm364, %v1014, -inf
  %v1212 = vmax.f32 %v1210, %v1211
  %v1213 = vsel %vm364, %v1017, -inf
  %v1214 = vmax.f32 %v1212, %v1213
  %v1215 = vsel %vm364, %v1019, -inf
  %v1216 = vmax.f32 %v1214, %v1215
  %v1217 = vsel %vm364, %v1022, -inf
  %v1218 = vmax.f32 %v1216, %v1217
  %v1219 = vsel %vm364, %v1024, -inf
  %v1220 = vmax.f32 %v1218, %v1219
  %v1221 = vrot.slane %v1220, 4
  %v1222 = vmax.f32 %v1220, %v1221
  %v1223 = vrot.slane %v1222, 2
  %v1224 = vmax.f32 %v1222, %v1223
  %v1225 = vrot.slane %v1224, 1
  %v1226 = vmax.f32 %v1224, %v1225
  %v1227 = vsel %vm364, %v1067, -inf
  %v1228 = vsel %vm364, %v1069, -inf
  %v1229 = vmax.f32 %v1227, %v1228
  %v1230 = vsel %vm364, %v1072, -inf
  %v1231 = vmax.f32 %v1229, %v1230
  %v1232 = vsel %vm364, %v1074, -inf
  %v1233 = vmax.f32 %v1231, %v1232
  %v1234 = vsel %vm364, %v1077, -inf
  %v1235 = vmax.f32 %v1233, %v1234
  %v1236 = vsel %vm364, %v1079, -inf
  %v1237 = vmax.f32 %v1235, %v1236
  %v1238 = vsel %vm364, %v1082, -inf
  %v1239 = vmax.f32 %v1237, %v1238
  %v1240 = vsel %vm364, %v1084, -inf
  %v1241 = vmax.f32 %v1239, %v1240
  %v1242 = vrot.slane %v1241, 4
  %v1243 = vmax.f32 %v1241, %v1242
  %v1244 = vrot.slane %v1243, 2
  %v1245 = vmax.f32 %v1243, %v1244
  %v1246 = vrot.slane %v1245, 1
  %v1247 = vmax.f32 %v1245, %v1246
  %v1248 = vsel %vm364, %v1127, -inf
  %v1249 = vsel %vm364, %v1129, -inf
  %v1250 = vmax.f32 %v1248, %v1249
  %v1251 = vsel %vm364, %v1132, -inf
  %v1252 = vmax.f32 %v1250, %v1251
  %v1253 = vsel %vm364, %v1134, -inf
  %v1254 = vmax.f32 %v1252, %v1253
  %v1255 = vsel %vm364, %v1137, -inf
  %v1256 = vmax.f32 %v1254, %v1255
  %v1257 = vsel %vm364, %v1139, -inf
  %v1258 = vmax.f32 %v1256, %v1257
  %v1259 = vsel %vm364, %v1142, -inf
  %v1260 = vmax.f32 %v1258, %v1259
  %v1261 = vsel %vm364, %v1144, -inf
  %v1262 = vmax.f32 %v1260, %v1261
  %v1263 = vrot.slane %v1262, 4
  %v1264 = vmax.f32 %v1262, %v1263
  %v1265 = vrot.slane %v1264, 2
  %v1266 = vmax.f32 %v1264, %v1265
  %v1267 = vrot.slane %v1266, 1
  %v1268 = vmax.f32 %v1266, %v1267
  %v1269 = vsel %vm364, %v1187, -inf
  %v1270 = vsel %vm364, %v1189, -inf
  %v1271 = vmax.f32 %v1269, %v1270
  %v1272 = vsel %vm364, %v1192, -inf
  %v1273 = vmax.f32 %v1271, %v1272
  %v1274 = vsel %vm364, %v1194, -inf
  %v1275 = vmax.f32 %v1273, %v1274
  %v1276 = vsel %vm364, %v1197, -inf
  %v1277 = vmax.f32 %v1275, %v1276
  %v1278 = vsel %vm364, %v1199, -inf
  %v1279 = vmax.f32 %v1277, %v1278
  %v1280 = vsel %vm364, %v1202, -inf
  %v1281 = vmax.f32 %v1279, %v1280
  %v1282 = vsel %vm364, %v1204, -inf
  %v1283 = vmax.f32 %v1281, %v1282
  %v1284 = vrot.slane %v1283, 4
  %v1285 = vmax.f32 %v1283, %v1284
  %v1286 = vrot.slane %v1285, 2
  %v1287 = vmax.f32 %v1285, %v1286
  %v1288 = vrot.slane %v1287, 1
  %v1289 = vmax.f32 %v1287, %v1288
  %v1290 = vsub.f32 %v1007, %v1226
  %v1291 = vsub.f32 %v1009, %v1226
  %v1292 = vsub.f32 %v1012, %v1226
  %v1293 = vsub.f32 %v1014, %v1226
  %v1294 = vsub.f32 %v1017, %v1226
  %v1295 = vsub.f32 %v1019, %v1226
  %v1296 = vsub.f32 %v1022, %v1226
  %v1297 = vsub.f32 %v1024, %v1226
  %v1298 = vsub.f32 %v1067, %v1247
  %v1299 = vsub.f32 %v1069, %v1247
  %v1300 = vsub.f32 %v1072, %v1247
  %v1301 = vsub.f32 %v1074, %v1247
  %v1302 = vsub.f32 %v1077, %v1247
  %v1303 = vsub.f32 %v1079, %v1247
  %v1304 = vsub.f32 %v1082, %v1247
  %v1305 = vsub.f32 %v1084, %v1247
  %v1306 = vsub.f32 %v1127, %v1268
  %v1307 = vsub.f32 %v1129, %v1268
  %v1308 = vsub.f32 %v1132, %v1268
  %v1309 = vsub.f32 %v1134, %v1268
  %v1310 = vsub.f32 %v1137, %v1268
  %v1311 = vsub.f32 %v1139, %v1268
  %v1312 = vsub.f32 %v1142, %v1268
  %v1313 = vsub.f32 %v1144, %v1268
  %v1314 = vsub.f32 %v1187, %v1289
  %v1315 = vsub.f32 %v1189, %v1289
  %v1316 = vsub.f32 %v1192, %v1289
  %v1317 = vsub.f32 %v1194, %v1289
  %v1318 = vsub.f32 %v1197, %v1289
  %v1319 = vsub.f32 %v1199, %v1289
  %v1320 = vsub.f32 %v1202, %v1289
  %v1321 = vsub.f32 %v1204, %v1289
  %v1322 = vmul.f32 %v1290, 1.442695
  %v1323 = vpow.pop %v1322
  %v1324 = vmul.f32 %v1291, 1.442695
  %v1325 = vpow.pop %v1324
  %v1326 = vmul.f32 %v1292, 1.442695
  %v1327 = vpow.pop %v1326
  %v1328 = vmul.f32 %v1293, 1.442695
  %v1329 = vpow.pop %v1328
  %v1330 = vmul.f32 %v1294, 1.442695
  %v1331 = vpow.pop %v1330
  %v1332 = vmul.f32 %v1295, 1.442695
  %v1333 = vpow.pop %v1332
  %v1334 = vmul.f32 %v1296, 1.442695
  %v1335 = vpow.pop %v1334
  %v1336 = vmul.f32 %v1297, 1.442695
  %v1337 = vpow.pop %v1336
  %v1338 = vmul.f32 %v1298, 1.442695
  %v1339 = vpow.pop %v1338
  %v1340 = vmul.f32 %v1299, 1.442695
  %v1341 = vpow.pop %v1340
  %v1342 = vmul.f32 %v1300, 1.442695
  %v1343 = vpow.pop %v1342
  %v1344 = vmul.f32 %v1301, 1.442695
  %v1345 = vpow.pop %v1344
  %v1346 = vmul.f32 %v1302, 1.442695
  %v1347 = vpow.pop %v1346
  %v1348 = vmul.f32 %v1303, 1.442695
  %v1349 = vpow.pop %v1348
  %v1350 = vmul.f32 %v1304, 1.442695
  %v1351 = vpow.pop %v1350
  %v1352 = vmul.f32 %v1305, 1.442695
  %v1353 = vpow.pop %v1352
  %v1354 = vmul.f32 %v1306, 1.442695
  %v1355 = vpow.pop %v1354
  %v1356 = vmul.f32 %v1307, 1.442695
  %v1357 = vpow.pop %v1356
  %v1358 = vmul.f32 %v1308, 1.442695
  %v1359 = vpow.pop %v1358
  %v1360 = vmul.f32 %v1309, 1.442695
  %v1361 = vpow.pop %v1360
  %v1362 = vmul.f32 %v1310, 1.442695
  %v1363 = vpow.pop %v1362
  %v1364 = vmul.f32 %v1311, 1.442695
  %v1365 = vpow.pop %v1364
  %v1366 = vmul.f32 %v1312, 1.442695
  %v1367 = vpow.pop %v1366
  %v1368 = vmul.f32 %v1313, 1.442695
  %v1369 = vpow.pop %v1368
  %v1370 = vmul.f32 %v1314, 1.442695
  %v1371 = vpow.pop %v1370
  %v1372 = vmul.f32 %v1315, 1.442695
  %v1373 = vpow.pop %v1372
  %v1374 = vmul.f32 %v1316, 1.442695
  %v1375 = vpow.pop %v1374
  %v1376 = vmul.f32 %v1317, 1.442695
  %v1377 = vpow.pop %v1376
  %v1378 = vmul.f32 %v1318, 1.442695
  %v1379 = vpow.pop %v1378
  %v1380 = vmul.f32 %v1319, 1.442695
  %v1381 = vpow.pop %v1380
  %v1382 = vmul.f32 %v1320, 1.442695
  %v1383 = vpow.pop %v1382
  %v1384 = vmul.f32 %v1321, 1.442695
  %v1385 = vpow.pop %v1384
  %v1386 = vsel %vm364, %v1323, 0.0
  %v1387 = vsel %vm364, %v1325, 0.0
  %v1388 = vadd.f32 %v1386, %v1387
  %v1389 = vsel %vm364, %v1327, 0.0
  %v1390 = vadd.f32 %v1388, %v1389
  %v1391 = vsel %vm364, %v1329, 0.0
  %v1392 = vadd.f32 %v1390, %v1391
  %v1393 = vsel %vm364, %v1331, 0.0
  %v1394 = vadd.f32 %v1392, %v1393
  %v1395 = vsel %vm364, %v1333, 0.0
  %v1396 = vadd.f32 %v1394, %v1395
  %v1397 = vsel %vm364, %v1335, 0.0
  %v1398 = vadd.f32 %v1396, %v1397
  %v1399 = vsel %vm364, %v1337, 0.0
  %v1400 = vadd.f32 %v1398, %v1399
  %v1401 = vrot.slane %v1400, 4
  %v1402 = vadd.f32 %v1400, %v1401
  %v1403 = vrot.slane %v1402, 2
  %v1404 = vadd.f32 %v1402, %v1403
  %v1405 = vrot.slane %v1404, 1
  %v1406 = vadd.f32 %v1404, %v1405
  %v1407 = vsel %vm364, %v1339, 0.0
  %v1408 = vsel %vm364, %v1341, 0.0
  %v1409 = vadd.f32 %v1407, %v1408
  %v1410 = vsel %vm364, %v1343, 0.0
  %v1411 = vadd.f32 %v1409, %v1410
  %v1412 = vsel %vm364, %v1345, 0.0
  %v1413 = vadd.f32 %v1411, %v1412
  %v1414 = vsel %vm364, %v1347, 0.0
  %v1415 = vadd.f32 %v1413, %v1414
  %v1416 = vsel %vm364, %v1349, 0.0
  %v1417 = vadd.f32 %v1415, %v1416
  %v1418 = vsel %vm364, %v1351, 0.0
  %v1419 = vadd.f32 %v1417, %v1418
  %v1420 = vsel %vm364, %v1353, 0.0
  %v1421 = vadd.f32 %v1419, %v1420
  %v1422 = vrot.slane %v1421, 4
  %v1423 = vadd.f32 %v1421, %v1422
  %v1424 = vrot.slane %v1423, 2
  %v1425 = vadd.f32 %v1423, %v1424
  %v1426 = vrot.slane %v1425, 1
  %v1427 = vadd.f32 %v1425, %v1426
  %v1428 = vsel %vm364, %v1355, 0.0
  %v1429 = vsel %vm364, %v1357, 0.0
  %v1430 = vadd.f32 %v1428, %v1429
  %v1431 = vsel %vm364, %v1359, 0.0
  %v1432 = vadd.f32 %v1430, %v1431
  %v1433 = vsel %vm364, %v1361, 0.0
  %v1434 = vadd.f32 %v1432, %v1433
  %v1435 = vsel %vm364, %v1363, 0.0
  %v1436 = vadd.f32 %v1434, %v1435
  %v1437 = vsel %vm364, %v1365, 0.0
  %v1438 = vadd.f32 %v1436, %v1437
  %v1439 = vsel %vm364, %v1367, 0.0
  %v1440 = vadd.f32 %v1438, %v1439
  %v1441 = vsel %vm364, %v1369, 0.0
  %v1442 = vadd.f32 %v1440, %v1441
  %v1443 = vrot.slane %v1442, 4
  %v1444 = vadd.f32 %v1442, %v1443
  %v1445 = vrot.slane %v1444, 2
  %v1446 = vadd.f32 %v1444, %v1445
  %v1447 = vrot.slane %v1446, 1
  %v1448 = vadd.f32 %v1446, %v1447
  %v1449 = vsel %vm364, %v1371, 0.0
  %v1450 = vsel %vm364, %v1373, 0.0
  %v1451 = vadd.f32 %v1449, %v1450
  %v1452 = vsel %vm364, %v1375, 0.0
  %v1453 = vadd.f32 %v1451, %v1452
  %v1454 = vsel %vm364, %v1377, 0.0
  %v1455 = vadd.f32 %v1453, %v1454
  %v1456 = vsel %vm364, %v1379, 0.0
  %v1457 = vadd.f32 %v1455, %v1456
  %v1458 = vsel %vm364, %v1381, 0.0
  %v1459 = vadd.f32 %v1457, %v1458
  %v1460 = vsel %vm364, %v1383, 0.0
  %v1461 = vadd.f32 %v1459, %v1460
  %v1462 = vsel %vm364, %v1385, 0.0
  %v1463 = vadd.f32 %v1461, %v1462
  %v1464 = vrot.slane %v1463, 4
  %v1465 = vadd.f32 %v1463, %v1464
  %v1466 = vrot.slane %v1465, 2
  %v1467 = vadd.f32 %v1465, %v1466
  %v1468 = vrot.slane %v1467, 1
  %v1469 = vadd.f32 %v1467, %v1468
  %v1470 = vrcp.pop %v1406
  %v1471 = vrcp.pop %v1427
  %v1472 = vrcp.pop %v1448
  %v1473 = vrcp.pop %v1469
  %v1474 = vmul.f32 %v1323, %v1470
  %v1475 = vmul.f32 %v1325, %v1470
  %v1476 = vmul.f32 %v1327, %v1470
  %v1477 = vmul.f32 %v1329, %v1470
  %v1478 = vmul.f32 %v1331, %v1470
  %v1479 = vmul.f32 %v1333, %v1470
  %v1480 = vmul.f32 %v1335, %v1470
  %v1481 = vmul.f32 %v1337, %v1470
  %v1482 = vmul.f32 %v1339, %v1471
  %v1483 = vmul.f32 %v1341, %v1471
  %v1484 = vmul.f32 %v1343, %v1471
  %v1485 = vmul.f32 %v1345, %v1471
  %v1486 = vmul.f32 %v1347, %v1471
  %v1487 = vmul.f32 %v1349, %v1471
  %v1488 = vmul.f32 %v1351, %v1471
  %v1489 = vmul.f32 %v1353, %v1471
  %v1490 = vmul.f32 %v1355, %v1472
  %v1491 = vmul.f32 %v1357, %v1472
  %v1492 = vmul.f32 %v1359, %v1472
  %v1493 = vmul.f32 %v1361, %v1472
  %v1494 = vmul.f32 %v1363, %v1472
  %v1495 = vmul.f32 %v1365, %v1472
  %v1496 = vmul.f32 %v1367, %v1472
  %v1497 = vmul.f32 %v1369, %v1472
  %v1498 = vmul.f32 %v1371, %v1473
  %v1499 = vmul.f32 %v1373, %v1473
  %v1500 = vmul.f32 %v1375, %v1473
  %v1501 = vmul.f32 %v1377, %v1473
  %v1502 = vmul.f32 %v1379, %v1473
  %v1503 = vmul.f32 %v1381, %v1473
  %v1504 = vmul.f32 %v1383, %v1473
  %v1505 = vmul.f32 %v1385, %v1473
  %v1506 = vpack.c.bf16 %v1474, %v1474
  %v1507 = vpack.c.bf16 %v1475, %v1475
  %v1508 = vpack.c.bf16 %v1476, %v1476
  %v1509 = vpack.c.bf16 %v1477, %v1477
  %v1510 = vpack.c.bf16 %v1478, %v1478
  %v1511 = vpack.c.bf16 %v1479, %v1479
  %v1512 = vpack.c.bf16 %v1480, %v1480
  %v1513 = vpack.c.bf16 %v1481, %v1481
  %v1514 = vpack.c.bf16 %v1482, %v1482
  %v1515 = vpack.c.bf16 %v1483, %v1483
  %v1516 = vpack.c.bf16 %v1484, %v1484
  %v1517 = vpack.c.bf16 %v1485, %v1485
  %v1518 = vpack.c.bf16 %v1486, %v1486
  %v1519 = vpack.c.bf16 %v1487, %v1487
  %v1520 = vpack.c.bf16 %v1488, %v1488
  %v1521 = vpack.c.bf16 %v1489, %v1489
  %v1522 = vpack.c.bf16 %v1490, %v1490
  %v1523 = vpack.c.bf16 %v1491, %v1491
  %v1524 = vpack.c.bf16 %v1492, %v1492
  %v1525 = vpack.c.bf16 %v1493, %v1493
  %v1526 = vpack.c.bf16 %v1494, %v1494
  %v1527 = vpack.c.bf16 %v1495, %v1495
  %v1528 = vpack.c.bf16 %v1496, %v1496
  %v1529 = vpack.c.bf16 %v1497, %v1497
  %v1530 = vpack.c.bf16 %v1498, %v1498
  %v1531 = vpack.c.bf16 %v1499, %v1499
  %v1532 = vpack.c.bf16 %v1500, %v1500
  %v1533 = vpack.c.bf16 %v1501, %v1501
  %v1534 = vpack.c.bf16 %v1502, %v1502
  %v1535 = vpack.c.bf16 %v1503, %v1503
  %v1536 = vpack.c.bf16 %v1504, %v1504
  %v1537 = vpack.c.bf16 %v1505, %v1505
  %v1546 = vunpack.c.l.b16 %v1506
  %v1547 = vunpack.c.l.b16 %v1507
  %v1548 = vunpack.c.l.b16 %v1508
  %v1549 = vunpack.c.l.b16 %v1509
  %v1550 = vunpack.c.l.b16 %v1510
  %v1551 = vunpack.c.l.b16 %v1511
  %v1552 = vunpack.c.l.b16 %v1512
  %v1553 = vunpack.c.l.b16 %v1513
  %v1554 = vpack.c.b16 %v1547, %v1546
  %v1555 = vpack.c.b16 %v1549, %v1548
  %v1556 = vpack.c.b16 %v1551, %v1550
  %v1557 = vpack.c.b16 %v1553, %v1552
  %v1563 = vsel %vm364, %v962, 0
  %1565 = vmatpush.bf16.msra.mxu0 0
  %1566 = vmatpush.bf16.msra.mxu0 0
  %1567 = vmatpush.bf16.msra.mxu0 0
  %1568 = vmatpush.bf16.msra.mxu0 0
  %1569 = vmatpush.bf16.msra.mxu0 %v1557
  %1570 = vmatpush.bf16.msra.mxu0 %v1556
  %1571 = vmatpush.bf16.msra.mxu0 %v1555
  %1572 = vmatpush.bf16.msra.mxu0 %v1554
  %1573 = vmatmul.bf16.gmra.mxu0 %v1563
  %v1574 = vpop.f32.mrf.mxu0
  %v1575 = vadd.f32 0.0, %v1574
  %v1576 = vpop.f32.mrf.mxu0
  %1577 = vdwg.mxu0
  %v1586 = vunpack.c.l.b16 %v1514
  %v1587 = vunpack.c.l.b16 %v1515
  %v1588 = vunpack.c.l.b16 %v1516
  %v1589 = vunpack.c.l.b16 %v1517
  %v1590 = vunpack.c.l.b16 %v1518
  %v1591 = vunpack.c.l.b16 %v1519
  %v1592 = vunpack.c.l.b16 %v1520
  %v1593 = vunpack.c.l.b16 %v1521
  %v1594 = vpack.c.b16 %v1587, %v1586
  %v1595 = vpack.c.b16 %v1589, %v1588
  %v1596 = vpack.c.b16 %v1591, %v1590
  %v1597 = vpack.c.b16 %v1593, %v1592
  %v1603 = vsel %vm364, %v963, 0
  %1605 = vmatpush.bf16.msra.mxu0 0
  %1606 = vmatpush.bf16.msra.mxu0 0
  %1607 = vmatpush.bf16.msra.mxu0 0
  %1608 = vmatpush.bf16.msra.mxu0 0
  %1609 = vmatpush.bf16.msra.mxu0 %v1597
  %1610 = vmatpush.bf16.msra.mxu0 %v1596
  %1611 = vmatpush.bf16.msra.mxu0 %v1595
  %1612 = vmatpush.bf16.msra.mxu0 %v1594
  %1613 = vmatmul.bf16.gmra.mxu0 %v1603
  %v1614 = vpop.f32.mrf.mxu0
  %v1615 = vadd.f32 0.0, %v1614
  %v1616 = vpop.f32.mrf.mxu0
  %1617 = vdwg.mxu0
  %v1626 = vunpack.c.l.b16 %v1522
  %v1627 = vunpack.c.l.b16 %v1523
  %v1628 = vunpack.c.l.b16 %v1524
  %v1629 = vunpack.c.l.b16 %v1525
  %v1630 = vunpack.c.l.b16 %v1526
  %v1631 = vunpack.c.l.b16 %v1527
  %v1632 = vunpack.c.l.b16 %v1528
  %v1633 = vunpack.c.l.b16 %v1529
  %v1634 = vpack.c.b16 %v1627, %v1626
  %v1635 = vpack.c.b16 %v1629, %v1628
  %v1636 = vpack.c.b16 %v1631, %v1630
  %v1637 = vpack.c.b16 %v1633, %v1632
  %v1643 = vsel %vm364, %v964, 0
  %1645 = vmatpush.bf16.msra.mxu0 0
  %1646 = vmatpush.bf16.msra.mxu0 0
  %1647 = vmatpush.bf16.msra.mxu0 0
  %1648 = vmatpush.bf16.msra.mxu0 0
  %1649 = vmatpush.bf16.msra.mxu0 %v1637
  %1650 = vmatpush.bf16.msra.mxu0 %v1636
  %1651 = vmatpush.bf16.msra.mxu0 %v1635
  %1652 = vmatpush.bf16.msra.mxu0 %v1634
  %1653 = vmatmul.bf16.gmra.mxu0 %v1643
  %v1654 = vpop.f32.mrf.mxu0
  %v1655 = vadd.f32 0.0, %v1654
  %v1656 = vpop.f32.mrf.mxu0
  %1657 = vdwg.mxu0
  %v1666 = vunpack.c.l.b16 %v1530
  %v1667 = vunpack.c.l.b16 %v1531
  %v1668 = vunpack.c.l.b16 %v1532
  %v1669 = vunpack.c.l.b16 %v1533
  %v1670 = vunpack.c.l.b16 %v1534
  %v1671 = vunpack.c.l.b16 %v1535
  %v1672 = vunpack.c.l.b16 %v1536
  %v1673 = vunpack.c.l.b16 %v1537
  %v1674 = vpack.c.b16 %v1667, %v1666
  %v1675 = vpack.c.b16 %v1669, %v1668
  %v1676 = vpack.c.b16 %v1671, %v1670
  %v1677 = vpack.c.b16 %v1673, %v1672
  %v1683 = vsel %vm364, %v965, 0
  %1685 = vmatpush.bf16.msra.mxu0 0
  %1686 = vmatpush.bf16.msra.mxu0 0
  %1687 = vmatpush.bf16.msra.mxu0 0
  %1688 = vmatpush.bf16.msra.mxu0 0
  %1689 = vmatpush.bf16.msra.mxu0 %v1677
  %1690 = vmatpush.bf16.msra.mxu0 %v1676
  %1691 = vmatpush.bf16.msra.mxu0 %v1675
  %1692 = vmatpush.bf16.msra.mxu0 %v1674
  %1693 = vmatmul.bf16.gmra.mxu0 %v1683
  %v1694 = vpop.f32.mrf.mxu0
  %v1695 = vadd.f32 0.0, %v1694
  %v1696 = vpop.f32.mrf.mxu0
  %1697 = vdwg.mxu0
  %v1698 = vpack.c.bf16 %v1615, %v1575
  %v1699 = vpack.c.bf16 %v1695, %v1655
  %1700 = vmatpush.bf16.msra.mxu0 0
  %1701 = vmatpush.bf16.msra.mxu0 0
  %1702 = vmatpush.bf16.msra.mxu0 0
  %1703 = vmatpush.bf16.msra.mxu0 0
  %1704 = vmatpush.bf16.msra.mxu0 0
  %1705 = vmatpush.bf16.msra.mxu0 0
  %1706 = vmatpush.bf16.msra.mxu0 %v1699
  %1707 = vmatpush.bf16.msra.mxu0 %v1698
  %1708 = vmatmul.bf16.gmra.mxu0 %v880
  %v1709 = vpop.f32.mrf.mxu0
  %v1710 = vadd.f32 %v862, %v1709
  %v1711 = vpop.f32.mrf.mxu0
  %v1712 = vadd.f32 %v867, %v1711
  %1713 = vmatmul.bf16.gmra.mxu0 %v883
  %v1714 = vpop.f32.mrf.mxu0
  %v1715 = vadd.f32 %v872, %v1714
  %v1716 = vpop.f32.mrf.mxu0
  %v1717 = vadd.f32 %v877, %v1716
  %1718 = vdwg.mxu0
  %s1719 = scalar_lea.vmem %s4, 32
  %1720 = vst.msk [vmem:[%s1719] sm:$0xff] %vm364, %v1710
  %1721 = vst.msk [vmem:[%s1719 + $0x8] sm:$0xff] %vm364, %v1712
  %1722 = vst.msk [vmem:[%s1719 + $0x10] sm:$0xff] %vm364, %v1715
  %1723 = vst.msk [vmem:[%s1719 + $0x18] sm:$0xff] %vm364, %v1717
  // Predicated region
  $region18: #{rpe_attention.1} parent=0 // pred_check
    _
  $region19: #{rpe_attention.1} parent=0 // pred_check_branch
    %1725 = sbr.rel (0) target = $region21
  $region20: #{rpe_attention.1} parent=0 // pred_region
    _
  $region21: #{rpe_attention.1} parent=0 // pred_fallthru
    _
  // Predicated region
  $region22: #{rpe_attention.1} parent=0 // pred_check
    _
  $region23: #{rpe_attention.1} parent=0 // pred_check_branch
    %1727 = sbr.rel (0) target = $region25
  $region24: #{rpe_attention.1} parent=0 // pred_region
    _
  $region25: #{rpe_attention.1} parent=0 // pred_fallthru
    _

</llo_original>
